<compile_context>
chip_gen: v7x
topology: tpu7x:2x2x1
jax: 0.10.0
libtpu: 0.0.40
codegen_flags: <defaults>
</compile_context>

<pallas_src>
import functools

import jax
import jax.numpy as jnp
from jax import lax
from jax.experimental import pallas as pl
from jax.experimental.pallas import tpu as pltpu


def _make_divisible(v, divisor, min_value=None):
    if min_value is None:
        min_value = divisor
    new_v = max(min_value, int(v + divisor / 2) // divisor * divisor)
    if new_v < 0.9 * v:
        new_v += divisor
    return new_v


def _hswish(x):
    return x * jnp.clip(x + 3.0, 0.0, 6.0) * (1.0 / 6.0)


def _hsigmoid(x):
    return jnp.clip(x + 3.0, 0.0, 6.0) * (1.0 / 6.0)


# ----------------------------- Pallas kernel --------------------------------
def _inverted_residual_kernel(
    x_ref, w1_ref, b1_ref, wdw_ref, b2_ref,
    f1w_ref, f1b_ref, f2w_ref, f2b_ref, w3_ref, b3_ref,
    o_ref, *, H, W, K, identity,
):
    Cin = x_ref.shape[-1]
    hidden = w1_ref.shape[-1]
    p = (K - 1) // 2

    xf = x_ref[0].astype(jnp.float32).reshape(H * W, Cin)        # (H*W, Cin)

    # --- 1x1 expand conv (BN1 scale pre-folded) + bias + h_swish ------------
    # bf16 MXU operands, f32 accumulation; element-wise math stays f32.
    h = jnp.dot(xf.astype(jnp.bfloat16), w1_ref[...].astype(jnp.bfloat16),
                preferred_element_type=jnp.float32)
    h = _hswish(h + b1_ref[...])
    h = h.reshape(H, W, hidden)                                  # (H, W, hidden)

    # --- depthwise KxK conv, stride 1, SAME (BN2 scale pre-folded) ----------
    # No padded copy: W-shifts via sublane roll + boundary mask, H-shifts via
    # major-axis slices with a single zero row.
    col = lax.broadcasted_iota(jnp.int32, (1, W, hidden), 1)
    h_shift_w = []
    for dj in range(K):
        oj = dj - p
        if oj == 0:
            h_shift_w.append(h)
        else:
            rolled = pltpu.roll(h, (-oj) % W, axis=1)            # XLU sublane rotate
            valid = jnp.logical_and(col + oj >= 0, col + oj < W)
            h_shift_w.append(jnp.where(valid, rolled, 0.0))

    wtaps = [wdw_ref[t:t + 1, :] for t in range(K * K)]          # hoisted tap weights

    acc = None
    for di in range(K):
        oi = di - p
        # contribution of input row (i + oi) to output row i, summed over dj
        g = h_shift_w[0] * wtaps[di * K + 0]
        for dj in range(1, K):
            g = g + h_shift_w[dj] * wtaps[di * K + dj]
        if oi > 0:
            g = jnp.concatenate(
                [g[oi:], jnp.zeros((oi, W, hidden), jnp.float32)], axis=0)
        elif oi < 0:
            g = jnp.concatenate(
                [jnp.zeros((-oi, W, hidden), jnp.float32), g[:oi]], axis=0)
        acc = g if acc is None else acc + g

    yf = acc.reshape(H * W, hidden) + b2_ref[...]                # (H*W, hidden)

    # --- SE: global avg-pool -> fc1 -> relu -> fc2 -> h_sigmoid -> scale ----
    s = jnp.mean(yf, axis=0, keepdims=True)                      # (1, hidden)
    z = jnp.dot(s, f1w_ref[...], preferred_element_type=jnp.float32) + f1b_ref[...]
    z = jnp.maximum(z, 0.0)
    gate = _hsigmoid(
        jnp.dot(z, f2w_ref[...], preferred_element_type=jnp.float32) + f2b_ref[...])
    yf = _hswish(yf * gate)

    # --- 1x1 project conv (BN3 scale pre-folded) + bias (+ residual) --------
    out = jnp.dot(yf.astype(jnp.bfloat16), w3_ref[...].astype(jnp.bfloat16),
                  preferred_element_type=jnp.float32)
    out = out + b3_ref[...]
    if identity:
        out = out + xf
    o_ref[0] = out.astype(o_ref.dtype)


# ------------------------------- wrapper -------------------------------------
def inverted_residual(x, params, *, kernel_size, stride, use_se, use_hs):
    # Implemented configuration: expand branch (inp != hidden), stride=1,
    # SE + h-swish; identity residual taken when Cin == oup.
    assert stride == 1 and use_se and use_hs
    B, H, W, Cin = x.shape
    oup = params[8].shape[-1]                      # w3: (hidden, oup)
    identity = (stride == 1 and Cin == oup)

    kern = functools.partial(_inverted_residual_kernel,
                             H=H, W=W, K=kernel_size, identity=identity)

    def full_spec(a):
        return pl.BlockSpec(a.shape, lambda b, nd=a.ndim: (0,) * nd)

    out = pl.pallas_call(
        kern,
        out_shape=jax.ShapeDtypeStruct((B, H * W, oup), jnp.float32),
        grid_spec=pltpu.PrefetchScalarGridSpec(
            num_scalar_prefetch=0,
            grid=(B,),
            in_specs=[pl.BlockSpec((1, H, W, Cin), lambda b: (b, 0, 0, 0))]
                     + [full_spec(p) for p in params],
            out_specs=pl.BlockSpec((1, H * W, oup), lambda b: (b, 0, 0)),
        ),
        compiler_params=pltpu.CompilerParams(
            dimension_semantics=("parallel",),
            vmem_limit_bytes=32 * 1024 * 1024,
        ),
    )(x, *params)
    return out.reshape(B, H, W, oup)


# --------------------------- parameter construction --------------------------
def init_params(key, inp, hidden, oup, K):
    """Returns BN-folded (eval mode) parameters:
    (w1, b1, wdw, b2, f1w, f1b, f2w, f2b, w3, b3), channel-last."""
    red = _make_divisible(hidden // 4, 8)
    keys = iter(jax.random.split(key, 19))
    nxt = lambda: next(keys)

    def n(shape, scale=0.2):
        return scale * jax.random.normal(nxt(), shape, jnp.float32)

    def bn(c):  # eval-mode BatchNorm -> (scale, bias), eps = 1e-5
        gamma = 1.0 + 0.1 * jax.random.normal(nxt(), (1, c), jnp.float32)
        beta = 0.1 * jax.random.normal(nxt(), (1, c), jnp.float32)
        mean = 0.1 * jax.random.normal(nxt(), (1, c), jnp.float32)
        var = 1.0 + jnp.abs(jax.random.normal(nxt(), (1, c), jnp.float32))
        scale = gamma / jnp.sqrt(var + 1e-5)
        return scale, beta - mean * scale

    w1 = n((inp, hidden)); s1, b1 = bn(hidden)          # 1x1 expand conv + BN1
    wdw = n((K * K, hidden)); s2, b2 = bn(hidden)       # depthwise conv + BN2
    f1w = n((hidden, red)); f1b = n((1, red))           # SE fc1
    f2w = n((red, hidden)); f2b = n((1, hidden))        # SE fc2
    w3 = n((hidden, oup)); s3, b3 = bn(oup)             # 1x1 project conv + BN3

    # fold BN scales into the conv weights (per output channel)
    w1 = w1 * s1
    wdw = wdw * s2
    w3 = w3 * s3
    return (w1, b1, wdw, b2, f1w, f1b, f2w, f2b, w3, b3)


# ------------------------------ pure-JAX reference ---------------------------
def reference(x, params, K):
    (w1, b1, wdw, b2, f1w, f1b, f2w, f2b, w3, b3) = params
    hidden = w1.shape[1]
    h = jnp.einsum('bhwc,cd->bhwd', x, w1, precision=lax.Precision.HIGHEST) + b1
    h = _hswish(h)
    dw = wdw.reshape(K, K, 1, hidden)
    y = lax.conv_general_dilated(
        h, dw, (1, 1), 'SAME',
        dimension_numbers=('NHWC', 'HWIO', 'NHWC'),
        feature_group_count=hidden, precision=lax.Precision.HIGHEST) + b2
    s = jnp.mean(y, axis=(1, 2))                                   # (B, hidden)
    z = jnp.maximum(s @ f1w + f1b, 0.0)
    g = _hsigmoid(z @ f2w + f2b)
    y = _hswish(y * g[:, None, None, :])
    out = jnp.einsum('bhwc,co->bhwo', y, w3, precision=lax.Precision.HIGHEST) + b3
    return out + x                                                 # identity path


if __name__ == "__main__":
    B, H, W = 2, 16, 16
    inp, hidden, oup, K = 8, 16, 8, 3      # inp != hidden -> expand branch
    stride, use_se, use_hs = 1, True, True

    key = jax.random.PRNGKey(0)
    kx, kp = jax.random.split(key)
    x = jax.random.normal(kx, (B, H, W, inp), jnp.float32)
    params = init_params(kp, inp, hidden, oup, K)

    out = inverted_residual(x, params, kernel_size=K, stride=stride,
                            use_se=use_se, use_hs=use_hs)
    out = jax.block_until_ready(out)

    ref = reference(x, params, K)
    err = float(jnp.max(jnp.abs(out - ref)))
    # bf16 MXU operands in the kernel vs. fp32 HIGHEST reference -> looser
    # tolerance, as anticipated in the performance review.
    assert jnp.allclose(out, ref, rtol=5e-2, atol=5e-2), f"max abs err {err}"
    print("KERNEL_OK")
</pallas_src>

<mosaic_0001>
module attributes {stable_mosaic.version = 11 : i64} {
  func.func @_inverted_residual_kernel(%arg0: i32, %arg1: memref<1x16x16x8xf32, #tpu.memory_space<vmem>>, %arg2: memref<8x16xf32, #tpu.memory_space<vmem>>, %arg3: memref<1x16xf32, #tpu.memory_space<vmem>>, %arg4: memref<9x16xf32, #tpu.memory_space<vmem>>, %arg5: memref<1x16xf32, #tpu.memory_space<vmem>>, %arg6: memref<16x8xf32, #tpu.memory_space<vmem>>, %arg7: memref<1x8xf32, #tpu.memory_space<vmem>>, %arg8: memref<8x16xf32, #tpu.memory_space<vmem>>, %arg9: memref<1x16xf32, #tpu.memory_space<vmem>>, %arg10: memref<16x8xf32, #tpu.memory_space<vmem>>, %arg11: memref<1x8xf32, #tpu.memory_space<vmem>>, %arg12: memref<1x256x8xf32, #tpu.memory_space<vmem>>) attributes {dimension_semantics = [#tpu.dimension_semantics<parallel>], iteration_bounds = array<i64: 2>, scalar_prefetch = 0 : i64, scratch_operands = 0 : i64, tpu.core_type = #tpu.core_type<tc>, window_params = [{transform_indices = @transform_0, window_bounds = array<i64: 1, 16, 16, 8>}, {pipeline_mode = #tpu.pipeline_mode<synchronous>, transform_indices = @transform_1, window_bounds = array<i64: 8, 16>}, {pipeline_mode = #tpu.pipeline_mode<synchronous>, transform_indices = @transform_2, window_bounds = array<i64: 1, 16>}, {pipeline_mode = #tpu.pipeline_mode<synchronous>, transform_indices = @transform_3, window_bounds = array<i64: 9, 16>}, {pipeline_mode = #tpu.pipeline_mode<synchronous>, transform_indices = @transform_4, window_bounds = array<i64: 1, 16>}, {pipeline_mode = #tpu.pipeline_mode<synchronous>, transform_indices = @transform_5, window_bounds = array<i64: 16, 8>}, {pipeline_mode = #tpu.pipeline_mode<synchronous>, transform_indices = @transform_6, window_bounds = array<i64: 1, 8>}, {pipeline_mode = #tpu.pipeline_mode<synchronous>, transform_indices = @transform_7, window_bounds = array<i64: 8, 16>}, {pipeline_mode = #tpu.pipeline_mode<synchronous>, transform_indices = @transform_8, window_bounds = array<i64: 1, 16>}, {pipeline_mode = #tpu.pipeline_mode<synchronous>, transform_indices = @transform_9, window_bounds = array<i64: 16, 8>}, {pipeline_mode = #tpu.pipeline_mode<synchronous>, transform_indices = @transform_10, window_bounds = array<i64: 1, 8>}, {transform_indices = @transform_11, window_bounds = array<i64: 1, 256, 8>}]} {
    %c0 = arith.constant 0 : index
    %c0_0 = arith.constant 0 : index
    %c0_1 = arith.constant 0 : index
    %c0_2 = arith.constant 0 : index
    %0 = vector.load %arg1[%c0, %c0_0, %c0_1, %c0_2] : memref<1x16x16x8xf32, #tpu.memory_space<vmem>>, vector<1x16x16x8xf32>
    %1 = vector.shape_cast %0 : vector<1x16x16x8xf32> to vector<16x16x8xf32>
    %2 = vector.shape_cast %1 : vector<16x16x8xf32> to vector<256x8xf32>
    %3 = arith.truncf %2 : vector<256x8xf32> to vector<256x8xbf16>
    %c0_3 = arith.constant 0 : index
    %c0_4 = arith.constant 0 : index
    %4 = vector.load %arg2[%c0_3, %c0_4] : memref<8x16xf32, #tpu.memory_space<vmem>>, vector<8x16xf32>
    %5 = arith.truncf %4 : vector<8x16xf32> to vector<8x16xbf16>
    %cst = arith.constant dense<0.000000e+00> : vector<256x16xf32>
    %6 = tpu.matmul %3, %5, %cst {dimension_numbers = #tpu.dot_dimension_numbers<[1], [0], [0], [1], [0, 0, 1, 1], [], []>} : vector<256x8xbf16>, vector<8x16xbf16>, vector<256x16xf32> -> vector<256x16xf32>
    %c0_5 = arith.constant 0 : index
    %c0_6 = arith.constant 0 : index
    %7 = vector.load %arg3[%c0_5, %c0_6] : memref<1x16xf32, #tpu.memory_space<vmem>>, vector<1x16xf32>
    %8 = vector.broadcast %7 : vector<1x16xf32> to vector<256x16xf32>
    %9 = arith.addf %6, %8 : vector<256x16xf32>
    %cst_7 = arith.constant 3.000000e+00 : f32
    %10 = vector.broadcast %cst_7 : f32 to vector<256x16xf32>
    %11 = arith.addf %9, %10 : vector<256x16xf32>
    %cst_8 = arith.constant 0.000000e+00 : f32
    %cst_9 = arith.constant 6.000000e+00 : f32
    %12 = vector.broadcast %cst_8 : f32 to vector<256x16xf32>
    %13 = arith.maximumf %12, %11 : vector<256x16xf32>
    %14 = vector.broadcast %cst_9 : f32 to vector<256x16xf32>
    %15 = arith.minimumf %14, %13 : vector<256x16xf32>
    %16 = arith.mulf %9, %15 : vector<256x16xf32>
    %cst_10 = arith.constant 0.166666672 : f32
    %17 = vector.broadcast %cst_10 : f32 to vector<256x16xf32>
    %18 = arith.mulf %16, %17 : vector<256x16xf32>
    %19 = vector.shape_cast %18 : vector<256x16xf32> to vector<16x16x16xf32>
    %20 = tpu.iota {dimensions = array<i32: 1>} : vector<1x16x16xi32>
    %c1_i32 = arith.constant 1 : i32
    %21 = tpu.dynamic_rotate %19 by %c1_i32 dim 1 : vector<16x16x16xf32>, i32 -> vector<16x16x16xf32>
    %c-1_i32 = arith.constant -1 : i32
    %22 = vector.broadcast %c-1_i32 : i32 to vector<1x16x16xi32>
    %23 = arith.addi %20, %22 : vector<1x16x16xi32>
    %c0_i32 = arith.constant 0 : i32
    %24 = vector.broadcast %c0_i32 : i32 to vector<1x16x16xi32>
    %25 = arith.cmpi sge, %23, %24 : vector<1x16x16xi32>
    %c-1_i32_11 = arith.constant -1 : i32
    %26 = vector.broadcast %c-1_i32_11 : i32 to vector<1x16x16xi32>
    %27 = arith.addi %20, %26 : vector<1x16x16xi32>
    %c16_i32 = arith.constant 16 : i32
    %28 = vector.broadcast %c16_i32 : i32 to vector<1x16x16xi32>
    %29 = arith.cmpi slt, %27, %28 : vector<1x16x16xi32>
    %30 = arith.andi %25, %29 : vector<1x16x16xi1>
    %cst_12 = arith.constant 0.000000e+00 : f32
    %31 = vector.shape_cast %30 : vector<1x16x16xi1> to vector<1x16x16xi1>
    %32 = vector.broadcast %31 : vector<1x16x16xi1> to vector<16x16x16xi1>
    %33 = vector.broadcast %cst_12 : f32 to vector<16x16x16xf32>
    %34 = arith.select %32, %21, %33 : vector<16x16x16xi1>, vector<16x16x16xf32>
    %c15_i32 = arith.constant 15 : i32
    %35 = tpu.dynamic_rotate %19 by %c15_i32 dim 1 : vector<16x16x16xf32>, i32 -> vector<16x16x16xf32>
    %c1_i32_13 = arith.constant 1 : i32
    %36 = vector.broadcast %c1_i32_13 : i32 to vector<1x16x16xi32>
    %37 = arith.addi %20, %36 : vector<1x16x16xi32>
    %c0_i32_14 = arith.constant 0 : i32
    %38 = vector.broadcast %c0_i32_14 : i32 to vector<1x16x16xi32>
    %39 = arith.cmpi sge, %37, %38 : vector<1x16x16xi32>
    %c1_i32_15 = arith.constant 1 : i32
    %40 = vector.broadcast %c1_i32_15 : i32 to vector<1x16x16xi32>
    %41 = arith.addi %20, %40 : vector<1x16x16xi32>
    %c16_i32_16 = arith.constant 16 : i32
    %42 = vector.broadcast %c16_i32_16 : i32 to vector<1x16x16xi32>
    %43 = arith.cmpi slt, %41, %42 : vector<1x16x16xi32>
    %44 = arith.andi %39, %43 : vector<1x16x16xi1>
    %cst_17 = arith.constant 0.000000e+00 : f32
    %45 = vector.shape_cast %44 : vector<1x16x16xi1> to vector<1x16x16xi1>
    %46 = vector.broadcast %45 : vector<1x16x16xi1> to vector<16x16x16xi1>
    %47 = vector.broadcast %cst_17 : f32 to vector<16x16x16xf32>
    %48 = arith.select %46, %35, %47 : vector<16x16x16xi1>, vector<16x16x16xf32>
    %c0_18 = arith.constant 0 : index
    %c0_19 = arith.constant 0 : index
    %49 = vector.load %arg4[%c0_18, %c0_19] : memref<9x16xf32, #tpu.memory_space<vmem>>, vector<1x16xf32>
    %c1 = arith.constant 1 : index
    %c0_20 = arith.constant 0 : index
    %50 = vector.load %arg4[%c1, %c0_20] : memref<9x16xf32, #tpu.memory_space<vmem>>, vector<1x16xf32>
    %c2 = arith.constant 2 : index
    %c0_21 = arith.constant 0 : index
    %51 = vector.load %arg4[%c2, %c0_21] : memref<9x16xf32, #tpu.memory_space<vmem>>, vector<1x16xf32>
    %c3 = arith.constant 3 : index
    %c0_22 = arith.constant 0 : index
    %52 = vector.load %arg4[%c3, %c0_22] : memref<9x16xf32, #tpu.memory_space<vmem>>, vector<1x16xf32>
    %c4 = arith.constant 4 : index
    %c0_23 = arith.constant 0 : index
    %53 = vector.load %arg4[%c4, %c0_23] : memref<9x16xf32, #tpu.memory_space<vmem>>, vector<1x16xf32>
    %c5 = arith.constant 5 : index
    %c0_24 = arith.constant 0 : index
    %54 = vector.load %arg4[%c5, %c0_24] : memref<9x16xf32, #tpu.memory_space<vmem>>, vector<1x16xf32>
    %c6 = arith.constant 6 : index
    %c0_25 = arith.constant 0 : index
    %55 = vector.load %arg4[%c6, %c0_25] : memref<9x16xf32, #tpu.memory_space<vmem>>, vector<1x16xf32>
    %c7 = arith.constant 7 : index
    %c0_26 = arith.constant 0 : index
    %56 = vector.load %arg4[%c7, %c0_26] : memref<9x16xf32, #tpu.memory_space<vmem>>, vector<1x16xf32>
    %c8 = arith.constant 8 : index
    %c0_27 = arith.constant 0 : index
    %57 = vector.load %arg4[%c8, %c0_27] : memref<9x16xf32, #tpu.memory_space<vmem>>, vector<1x16xf32>
    %58 = vector.shape_cast %49 : vector<1x16xf32> to vector<1x1x16xf32>
    %59 = vector.broadcast %58 : vector<1x1x16xf32> to vector<16x16x16xf32>
    %60 = arith.mulf %34, %59 : vector<16x16x16xf32>
    %61 = vector.shape_cast %50 : vector<1x16xf32> to vector<1x1x16xf32>
    %62 = vector.broadcast %61 : vector<1x1x16xf32> to vector<16x16x16xf32>
    %63 = arith.mulf %19, %62 : vector<16x16x16xf32>
    %64 = arith.addf %60, %63 : vector<16x16x16xf32>
    %65 = vector.shape_cast %51 : vector<1x16xf32> to vector<1x1x16xf32>
    %66 = vector.broadcast %65 : vector<1x1x16xf32> to vector<16x16x16xf32>
    %67 = arith.mulf %48, %66 : vector<16x16x16xf32>
    %68 = arith.addf %64, %67 : vector<16x16x16xf32>
    %cst_28 = arith.constant 0.000000e+00 : f32
    %69 = vector.broadcast %cst_28 : f32 to vector<1x16x16xf32>
    %70 = vector.extract_strided_slice %68 {offsets = [0, 0, 0], sizes = [15, 16, 16], strides = [1, 1, 1]} : vector<16x16x16xf32> to vector<15x16x16xf32>
    %71 = tpu.concatenate %69, %70 in 0 : vector<1x16x16xf32>, vector<15x16x16xf32> -> vector<16x16x16xf32>
    %72 = vector.shape_cast %52 : vector<1x16xf32> to vector<1x1x16xf32>
    %73 = vector.broadcast %72 : vector<1x1x16xf32> to vector<16x16x16xf32>
    %74 = arith.mulf %34, %73 : vector<16x16x16xf32>
    %75 = vector.shape_cast %53 : vector<1x16xf32> to vector<1x1x16xf32>
    %76 = vector.broadcast %75 : vector<1x1x16xf32> to vector<16x16x16xf32>
    %77 = arith.mulf %19, %76 : vector<16x16x16xf32>
    %78 = arith.addf %74, %77 : vector<16x16x16xf32>
    %79 = vector.shape_cast %54 : vector<1x16xf32> to vector<1x1x16xf32>
    %80 = vector.broadcast %79 : vector<1x1x16xf32> to vector<16x16x16xf32>
    %81 = arith.mulf %48, %80 : vector<16x16x16xf32>
    %82 = arith.addf %78, %81 : vector<16x16x16xf32>
    %83 = arith.addf %71, %82 : vector<16x16x16xf32>
    %84 = vector.shape_cast %55 : vector<1x16xf32> to vector<1x1x16xf32>
    %85 = vector.broadcast %84 : vector<1x1x16xf32> to vector<16x16x16xf32>
    %86 = arith.mulf %34, %85 : vector<16x16x16xf32>
    %87 = vector.shape_cast %56 : vector<1x16xf32> to vector<1x1x16xf32>
    %88 = vector.broadcast %87 : vector<1x1x16xf32> to vector<16x16x16xf32>
    %89 = arith.mulf %19, %88 : vector<16x16x16xf32>
    %90 = arith.addf %86, %89 : vector<16x16x16xf32>
    %91 = vector.shape_cast %57 : vector<1x16xf32> to vector<1x1x16xf32>
    %92 = vector.broadcast %91 : vector<1x1x16xf32> to vector<16x16x16xf32>
    %93 = arith.mulf %48, %92 : vector<16x16x16xf32>
    %94 = arith.addf %90, %93 : vector<16x16x16xf32>
    %95 = vector.extract_strided_slice %94 {offsets = [1, 0, 0], sizes = [15, 16, 16], strides = [1, 1, 1]} : vector<16x16x16xf32> to vector<15x16x16xf32>
    %cst_29 = arith.constant 0.000000e+00 : f32
    %96 = vector.broadcast %cst_29 : f32 to vector<1x16x16xf32>
    %97 = tpu.concatenate %95, %96 in 0 : vector<15x16x16xf32>, vector<1x16x16xf32> -> vector<16x16x16xf32>
    %98 = arith.addf %83, %97 : vector<16x16x16xf32>
    %99 = vector.shape_cast %98 : vector<16x16x16xf32> to vector<256x16xf32>
    %c0_30 = arith.constant 0 : index
    %c0_31 = arith.constant 0 : index
    %100 = vector.load %arg5[%c0_30, %c0_31] : memref<1x16xf32, #tpu.memory_space<vmem>>, vector<1x16xf32>
    %101 = vector.broadcast %100 : vector<1x16xf32> to vector<256x16xf32>
    %102 = arith.addf %99, %101 : vector<256x16xf32>
    %cst_32 = arith.constant dense<0.000000e+00> : vector<16xf32>
    %103 = vector.multi_reduction <add>, %102, %cst_32 [0] : vector<256x16xf32> to vector<16xf32>
    %104 = vector.shape_cast %103 : vector<16xf32> to vector<1x16xf32>
    %cst_33 = arith.constant 2.560000e+02 : f32
    %105 = vector.broadcast %cst_33 : f32 to vector<1x16xf32>
    %106 = arith.divf %104, %105 : vector<1x16xf32>
    %c0_34 = arith.constant 0 : index
    %c0_35 = arith.constant 0 : index
    %107 = vector.load %arg6[%c0_34, %c0_35] : memref<16x8xf32, #tpu.memory_space<vmem>>, vector<16x8xf32>
    %cst_36 = arith.constant dense<0.000000e+00> : vector<1x8xf32>
    %108 = tpu.matmul %106, %107, %cst_36 {dimension_numbers = #tpu.dot_dimension_numbers<[1], [0], [0], [1], [0, 0, 1, 1], [], []>} : vector<1x16xf32>, vector<16x8xf32>, vector<1x8xf32> -> vector<1x8xf32>
    %c0_37 = arith.constant 0 : index
    %c0_38 = arith.constant 0 : index
    %109 = vector.load %arg7[%c0_37, %c0_38] : memref<1x8xf32, #tpu.memory_space<vmem>>, vector<1x8xf32>
    %110 = arith.addf %108, %109 : vector<1x8xf32>
    %cst_39 = arith.constant 0.000000e+00 : f32
    %111 = vector.broadcast %cst_39 : f32 to vector<1x8xf32>
    %112 = arith.maximumf %110, %111 : vector<1x8xf32>
    %c0_40 = arith.constant 0 : index
    %c0_41 = arith.constant 0 : index
    %113 = vector.load %arg8[%c0_40, %c0_41] : memref<8x16xf32, #tpu.memory_space<vmem>>, vector<8x16xf32>
    %cst_42 = arith.constant dense<0.000000e+00> : vector<1x16xf32>
    %114 = tpu.matmul %112, %113, %cst_42 {dimension_numbers = #tpu.dot_dimension_numbers<[1], [0], [0], [1], [0, 0, 1, 1], [], []>} : vector<1x8xf32>, vector<8x16xf32>, vector<1x16xf32> -> vector<1x16xf32>
    %c0_43 = arith.constant 0 : index
    %c0_44 = arith.constant 0 : index
    %115 = vector.load %arg9[%c0_43, %c0_44] : memref<1x16xf32, #tpu.memory_space<vmem>>, vector<1x16xf32>
    %116 = arith.addf %114, %115 : vector<1x16xf32>
    %cst_45 = arith.constant 3.000000e+00 : f32
    %117 = vector.broadcast %cst_45 : f32 to vector<1x16xf32>
    %118 = arith.addf %116, %117 : vector<1x16xf32>
    %cst_46 = arith.constant 0.000000e+00 : f32
    %cst_47 = arith.constant 6.000000e+00 : f32
    %119 = vector.broadcast %cst_46 : f32 to vector<1x16xf32>
    %120 = arith.maximumf %119, %118 : vector<1x16xf32>
    %121 = vector.broadcast %cst_47 : f32 to vector<1x16xf32>
    %122 = arith.minimumf %121, %120 : vector<1x16xf32>
    %cst_48 = arith.constant 0.166666672 : f32
    %123 = vector.broadcast %cst_48 : f32 to vector<1x16xf32>
    %124 = arith.mulf %122, %123 : vector<1x16xf32>
    %125 = vector.broadcast %124 : vector<1x16xf32> to vector<256x16xf32>
    %126 = arith.mulf %102, %125 : vector<256x16xf32>
    %cst_49 = arith.constant 3.000000e+00 : f32
    %127 = vector.broadcast %cst_49 : f32 to vector<256x16xf32>
    %128 = arith.addf %126, %127 : vector<256x16xf32>
    %cst_50 = arith.constant 0.000000e+00 : f32
    %cst_51 = arith.constant 6.000000e+00 : f32
    %129 = vector.broadcast %cst_50 : f32 to vector<256x16xf32>
    %130 = arith.maximumf %129, %128 : vector<256x16xf32>
    %131 = vector.broadcast %cst_51 : f32 to vector<256x16xf32>
    %132 = arith.minimumf %131, %130 : vector<256x16xf32>
    %133 = arith.mulf %126, %132 : vector<256x16xf32>
    %cst_52 = arith.constant 0.166666672 : f32
    %134 = vector.broadcast %cst_52 : f32 to vector<256x16xf32>
    %135 = arith.mulf %133, %134 : vector<256x16xf32>
    %136 = arith.truncf %135 : vector<256x16xf32> to vector<256x16xbf16>
    %c0_53 = arith.constant 0 : index
    %c0_54 = arith.constant 0 : index
    %137 = vector.load %arg10[%c0_53, %c0_54] : memref<16x8xf32, #tpu.memory_space<vmem>>, vector<16x8xf32>
    %138 = arith.truncf %137 : vector<16x8xf32> to vector<16x8xbf16>
    %cst_55 = arith.constant dense<0.000000e+00> : vector<256x8xf32>
    %139 = tpu.matmul %136, %138, %cst_55 {dimension_numbers = #tpu.dot_dimension_numbers<[1], [0], [0], [1], [0, 0, 1, 1], [], []>} : vector<256x16xbf16>, vector<16x8xbf16>, vector<256x8xf32> -> vector<256x8xf32>
    %c0_56 = arith.constant 0 : index
    %c0_57 = arith.constant 0 : index
    %140 = vector.load %arg11[%c0_56, %c0_57] : memref<1x8xf32, #tpu.memory_space<vmem>>, vector<1x8xf32>
    %141 = vector.broadcast %140 : vector<1x8xf32> to vector<256x8xf32>
    %142 = arith.addf %139, %141 : vector<256x8xf32>
    %143 = arith.addf %142, %2 : vector<256x8xf32>
    %c0_58 = arith.constant 0 : index
    %c0_59 = arith.constant 0 : index
    %c0_60 = arith.constant 0 : index
    %144 = vector.load %arg12[%c0_58, %c0_59, %c0_60] : memref<1x256x8xf32, #tpu.memory_space<vmem>>, vector<1x256x8xf32>
    %145 = vector.shape_cast %144 : vector<1x256x8xf32> to vector<256x8xf32>
    %146 = vector.shape_cast %143 : vector<256x8xf32> to vector<1x256x8xf32>
    tpu.vector_store %arg12[%c0_58, %c0_59, %c0_60], %146 {strides = array<i32>} : memref<1x256x8xf32, #tpu.memory_space<vmem>>, vector<1x256x8xf32>,
    return
  }
  func.func @transform_0(%arg0: i32) -> (i32, i32, i32, i32) {
    %c0_i32 = arith.constant 0 : i32
    %c0_i32_0 = arith.constant 0 : i32
    %c0_i32_1 = arith.constant 0 : i32
    %c0_i32_2 = arith.constant 0 : i32
    return %arg0, %c0_i32, %c0_i32_0, %c0_i32_1 : i32, i32, i32, i32
  }
  func.func @transform_1(%arg0: i32) -> (i32, i32) {
    %c0_i32 = arith.constant 0 : i32
    %c0_i32_0 = arith.constant 0 : i32
    %c0_i32_1 = arith.constant 0 : i32
    return %c0_i32, %c0_i32_0 : i32, i32
  }
  func.func @transform_2(%arg0: i32) -> (i32, i32) {
    %c0_i32 = arith.constant 0 : i32
    %c0_i32_0 = arith.constant 0 : i32
    %c0_i32_1 = arith.constant 0 : i32
    return %c0_i32, %c0_i32_0 : i32, i32
  }
  func.func @transform_3(%arg0: i32) -> (i32, i32) {
    %c0_i32 = arith.constant 0 : i32
    %c0_i32_0 = arith.constant 0 : i32
    %c0_i32_1 = arith.constant 0 : i32
    return %c0_i32, %c0_i32_0 : i32, i32
  }
  func.func @transform_4(%arg0: i32) -> (i32, i32) {
    %c0_i32 = arith.constant 0 : i32
    %c0_i32_0 = arith.constant 0 : i32
    %c0_i32_1 = arith.constant 0 : i32
    return %c0_i32, %c0_i32_0 : i32, i32
  }
  func.func @transform_5(%arg0: i32) -> (i32, i32) {
    %c0_i32 = arith.constant 0 : i32
    %c0_i32_0 = arith.constant 0 : i32
    %c0_i32_1 = arith.constant 0 : i32
    return %c0_i32, %c0_i32_0 : i32, i32
  }
  func.func @transform_6(%arg0: i32) -> (i32, i32) {
    %c0_i32 = arith.constant 0 : i32
    %c0_i32_0 = arith.constant 0 : i32
    %c0_i32_1 = arith.constant 0 : i32
    return %c0_i32, %c0_i32_0 : i32, i32
  }
  func.func @transform_7(%arg0: i32) -> (i32, i32) {
    %c0_i32 = arith.constant 0 : i32
    %c0_i32_0 = arith.constant 0 : i32
    %c0_i32_1 = arith.constant 0 : i32
    return %c0_i32, %c0_i32_0 : i32, i32
  }
  func.func @transform_8(%arg0: i32) -> (i32, i32) {
    %c0_i32 = arith.constant 0 : i32
    %c0_i32_0 = arith.constant 0 : i32
    %c0_i32_1 = arith.constant 0 : i32
    return %c0_i32, %c0_i32_0 : i32, i32
  }
  func.func @transform_9(%arg0: i32) -> (i32, i32) {
    %c0_i32 = arith.constant 0 : i32
    %c0_i32_0 = arith.constant 0 : i32
    %c0_i32_1 = arith.constant 0 : i32
    return %c0_i32, %c0_i32_0 : i32, i32
  }
  func.func @transform_10(%arg0: i32) -> (i32, i32) {
    %c0_i32 = arith.constant 0 : i32
    %c0_i32_0 = arith.constant 0 : i32
    %c0_i32_1 = arith.constant 0 : i32
    return %c0_i32, %c0_i32_0 : i32, i32
  }
  func.func @transform_11(%arg0: i32) -> (i32, i32, i32) {
    %c0_i32 = arith.constant 0 : i32
    %c0_i32_0 = arith.constant 0 : i32
    %c0_i32_1 = arith.constant 0 : i32
    return %arg0, %c0_i32, %c0_i32_0 : i32, i32, i32
  }
}

</mosaic_0001>

<llo_original>
// kernel: tpu_custom_call.1
$region0: #{tpu_custom_call.1}
  #allocation0 [shape = 'u32[]', space=smem, size = 0x4, offset = 0x4, fixed_abs, tag = 'smem constant byte address 0x4 - core index']
  #allocation1 [shape = 'u32[144,128]{1,0:T(1,128)}', space=vmem, size = 0x12000, scoped, tag = 'internal scratch']
  %s0 = inlined_call_operand.vmem [shape: f32[2,16,16,8], index: 0, kind: input, shape index: {}]
  %s1 = inlined_call_operand.vmem [shape: f32[8,16], index: 1, kind: input, shape index: {}]
  %s2 = inlined_call_operand.vmem [shape: f32[1,16], index: 2, kind: input, shape index: {}]
  %s3 = inlined_call_operand.vmem [shape: f32[9,16], index: 3, kind: input, shape index: {}]
  %s4 = inlined_call_operand.vmem [shape: f32[1,16], index: 4, kind: input, shape index: {}]
  %s5 = inlined_call_operand.vmem [shape: f32[16,8], index: 5, kind: input, shape index: {}]
  %s6 = inlined_call_operand.vmem [shape: f32[1,8], index: 6, kind: input, shape index: {}]
  %s7 = inlined_call_operand.vmem [shape: f32[8,16], index: 7, kind: input, shape index: {}]
  %s8 = inlined_call_operand.vmem [shape: f32[1,16], index: 8, kind: input, shape index: {}]
  %s9 = inlined_call_operand.vmem [shape: f32[16,8], index: 9, kind: input, shape index: {}]
  %s10 = inlined_call_operand.vmem [shape: f32[1,8], index: 10, kind: input, shape index: {}]
  %s11 = inlined_call_operand.vmem [shape: f32[2,256,8], index: 11, kind: output, shape index: {}]
  %s12 = sld [smem:[#allocation0]]
  $region77: #{tpu_custom_call.1} parent=0
    _
  %s14 = ssub.s32 1, %s12
  %s15 = scalar_select 0, %s14, %s12
  loop: start=0, step=1, limit=4
  $region2: #{tpu_custom_call.1} parent=0 // loop_pre_header
    _
  $region3: #{tpu_custom_call.1} parent=0 // loop_header
    %s17 = sphi 0, %s21
    %p18 = scmp.ge.s32.totalorder %s17, 4
    %s27 = sphi 0, %s29
    %s30 = sphi 0, %s27
    %s31 = sphi 0, %s30
    %s47 = sphi 0, %s31
    %s51 = sphi 0, %s51
    %s53 = sphi 0, %s51
    %s54 = sphi 0, %s53
    %s68 = sphi 0, %s54
    %s72 = sphi 0, %s72
    %s74 = sphi 0, %s72
    %s75 = sphi 0, %s74
    %s89 = sphi 0, %s75
    %s93 = sphi 0, %s93
    %s95 = sphi 0, %s93
    %s96 = sphi 0, %s95
    %s110 = sphi 0, %s96
    %s114 = sphi 0, %s114
    %s116 = sphi 0, %s114
    %s117 = sphi 0, %s116
    %s131 = sphi 0, %s117
    %s135 = sphi 0, %s135
    %s137 = sphi 0, %s135
    %s138 = sphi 0, %s137
    %s152 = sphi 0, %s138
    %s156 = sphi 0, %s156
    %s158 = sphi 0, %s156
    %s159 = sphi 0, %s158
    %s173 = sphi 0, %s159
    %s177 = sphi 0, %s177
    %s179 = sphi 0, %s177
    %s180 = sphi 0, %s179
    %s194 = sphi 0, %s180
    %s198 = sphi 0, %s198
    %s200 = sphi 0, %s198
    %s201 = sphi 0, %s200
    %s215 = sphi 0, %s201
    %s219 = sphi 0, %s219
    %s221 = sphi 0, %s219
    %s222 = sphi 0, %s221
    %s236 = sphi 0, %s222
    %s240 = sphi 0, %s240
    %s242 = sphi 0, %s240
    %s243 = sphi 0, %s242
    %s257 = sphi 0, %s243
    %s263 = sphi 0, %s265
    %s266 = sphi 0, %s263
    %s267 = sphi 0, %s266
    %s283 = sphi 0, %s267
  $region4: #{tpu_custom_call.1} parent=0 // loop_header_branch
    %20 = sbr.rel (%p18) target = $region8
  $region5: #{tpu_custom_call.1} parent=0 // loop_body
    %s22 = ssub.s32 %s17, 1
    %s23 = ssub.s32 %s17, 2
    %s24 = sadd.s32 %s17, 1
    %s25 = ssub.s32 %s17, %s24
    %p26 = scmp.eq.s32.totalorder %s25, 0
    %s28 = sadd.s32 %s27, 1
    %s29 = scalar_select %p26, %s27, %s28
    %p32 = pneg %p26
    %p33 = scmp.eq.s32.totalorder %s17, 1
    %p34 = por %p32, %p33
    %p35 = scmp.ne.s32.totalorder %s27, %s30
    %p36 = scmp.eq.s32.totalorder %s17, 0
    %p37 = por %p35, %p36
    %p38 = scmp.ne.s32.totalorder %s27, %s30
    %p39 = scmp.eq.s32.totalorder %s22, 1
    %p40 = por %p38, %p39
    %p41 = scmp.ne.s32.totalorder %s30, %s31
    %p42 = scmp.eq.s32.totalorder %s22, 0
    %p43 = por %p41, %p42
    %p44 = scmp.ne.s32.totalorder %s30, %s31
    %p45 = scmp.eq.s32.totalorder %s23, 1
    %p46 = por %p44, %p45
    %p48 = scmp.ne.s32.totalorder %s31, %s47
    %p49 = scmp.eq.s32.totalorder %s23, 0
    %p50 = por %p48, %p49
    %s52 = sadd.s32 %s51, 1
    %p55 = scmp.eq.s32.totalorder %s17, 1
    %p56 = scmp.ne.s32.totalorder %s51, %s53
    %p57 = scmp.eq.s32.totalorder %s17, 0
    %p58 = por %p56, %p57
    %p59 = scmp.ne.s32.totalorder %s51, %s53
    %p60 = scmp.eq.s32.totalorder %s22, 1
    %p61 = por %p59, %p60
    %p62 = scmp.ne.s32.totalorder %s53, %s54
    %p63 = scmp.eq.s32.totalorder %s22, 0
    %p64 = por %p62, %p63
    %p65 = scmp.ne.s32.totalorder %s53, %s54
    %p66 = scmp.eq.s32.totalorder %s23, 1
    %p67 = por %p65, %p66
    %p69 = scmp.ne.s32.totalorder %s54, %s68
    %p70 = scmp.eq.s32.totalorder %s23, 0
    %p71 = por %p69, %p70
    %s73 = sadd.s32 %s72, 1
    %p76 = scmp.eq.s32.totalorder %s17, 1
    %p77 = scmp.ne.s32.totalorder %s72, %s74
    %p78 = scmp.eq.s32.totalorder %s17, 0
    %p79 = por %p77, %p78
    %p80 = scmp.ne.s32.totalorder %s72, %s74
    %p81 = scmp.eq.s32.totalorder %s22, 1
    %p82 = por %p80, %p81
    %p83 = scmp.ne.s32.totalorder %s74, %s75
    %p84 = scmp.eq.s32.totalorder %s22, 0
    %p85 = por %p83, %p84
    %p86 = scmp.ne.s32.totalorder %s74, %s75
    %p87 = scmp.eq.s32.totalorder %s23, 1
    %p88 = por %p86, %p87
    %p90 = scmp.ne.s32.totalorder %s75, %s89
    %p91 = scmp.eq.s32.totalorder %s23, 0
    %p92 = por %p90, %p91
    %s94 = sadd.s32 %s93, 1
    %p97 = scmp.eq.s32.totalorder %s17, 1
    %p98 = scmp.ne.s32.totalorder %s93, %s95
    %p99 = scmp.eq.s32.totalorder %s17, 0
    %p100 = por %p98, %p99
    %p101 = scmp.ne.s32.totalorder %s93, %s95
    %p102 = scmp.eq.s32.totalorder %s22, 1
    %p103 = por %p101, %p102
    %p104 = scmp.ne.s32.totalorder %s95, %s96
    %p105 = scmp.eq.s32.totalorder %s22, 0
    %p106 = por %p104, %p105
    %p107 = scmp.ne.s32.totalorder %s95, %s96
    %p108 = scmp.eq.s32.totalorder %s23, 1
    %p109 = por %p107, %p108
    %p111 = scmp.ne.s32.totalorder %s96, %s110
    %p112 = scmp.eq.s32.totalorder %s23, 0
    %p113 = por %p111, %p112
    %s115 = sadd.s32 %s114, 1
    %p118 = scmp.eq.s32.totalorder %s17, 1
    %p119 = scmp.ne.s32.totalorder %s114, %s116
    %p120 = scmp.eq.s32.totalorder %s17, 0
    %p121 = por %p119, %p120
    %p122 = scmp.ne.s32.totalorder %s114, %s116
    %p123 = scmp.eq.s32.totalorder %s22, 1
    %p124 = por %p122, %p123
    %p125 = scmp.ne.s32.totalorder %s116, %s117
    %p126 = scmp.eq.s32.totalorder %s22, 0
    %p127 = por %p125, %p126
    %p128 = scmp.ne.s32.totalorder %s116, %s117
    %p129 = scmp.eq.s32.totalorder %s23, 1
    %p130 = por %p128, %p129
    %p132 = scmp.ne.s32.totalorder %s117, %s131
    %p133 = scmp.eq.s32.totalorder %s23, 0
    %p134 = por %p132, %p133
    %s136 = sadd.s32 %s135, 1
    %p139 = scmp.eq.s32.totalorder %s17, 1
    %p140 = scmp.ne.s32.totalorder %s135, %s137
    %p141 = scmp.eq.s32.totalorder %s17, 0
    %p142 = por %p140, %p141
    %p143 = scmp.ne.s32.totalorder %s135, %s137
    %p144 = scmp.eq.s32.totalorder %s22, 1
    %p145 = por %p143, %p144
    %p146 = scmp.ne.s32.totalorder %s137, %s138
    %p147 = scmp.eq.s32.totalorder %s22, 0
    %p148 = por %p146, %p147
    %p149 = scmp.ne.s32.totalorder %s137, %s138
    %p150 = scmp.eq.s32.totalorder %s23, 1
    %p151 = por %p149, %p150
    %p153 = scmp.ne.s32.totalorder %s138, %s152
    %p154 = scmp.eq.s32.totalorder %s23, 0
    %p155 = por %p153, %p154
    %s157 = sadd.s32 %s156, 1
    %p160 = scmp.eq.s32.totalorder %s17, 1
    %p161 = scmp.ne.s32.totalorder %s156, %s158
    %p162 = scmp.eq.s32.totalorder %s17, 0
    %p163 = por %p161, %p162
    %p164 = scmp.ne.s32.totalorder %s156, %s158
    %p165 = scmp.eq.s32.totalorder %s22, 1
    %p166 = por %p164, %p165
    %p167 = scmp.ne.s32.totalorder %s158, %s159
    %p168 = scmp.eq.s32.totalorder %s22, 0
    %p169 = por %p167, %p168
    %p170 = scmp.ne.s32.totalorder %s158, %s159
    %p171 = scmp.eq.s32.totalorder %s23, 1
    %p172 = por %p170, %p171
    %p174 = scmp.ne.s32.totalorder %s159, %s173
    %p175 = scmp.eq.s32.totalorder %s23, 0
    %p176 = por %p174, %p175
    %s178 = sadd.s32 %s177, 1
    %p181 = scmp.eq.s32.totalorder %s17, 1
    %p182 = scmp.ne.s32.totalorder %s177, %s179
    %p183 = scmp.eq.s32.totalorder %s17, 0
    %p184 = por %p182, %p183
    %p185 = scmp.ne.s32.totalorder %s177, %s179
    %p186 = scmp.eq.s32.totalorder %s22, 1
    %p187 = por %p185, %p186
    %p188 = scmp.ne.s32.totalorder %s179, %s180
    %p189 = scmp.eq.s32.totalorder %s22, 0
    %p190 = por %p188, %p189
    %p191 = scmp.ne.s32.totalorder %s179, %s180
    %p192 = scmp.eq.s32.totalorder %s23, 1
    %p193 = por %p191, %p192
    %p195 = scmp.ne.s32.totalorder %s180, %s194
    %p196 = scmp.eq.s32.totalorder %s23, 0
    %p197 = por %p195, %p196
    %s199 = sadd.s32 %s198, 1
    %p202 = scmp.eq.s32.totalorder %s17, 1
    %p203 = scmp.ne.s32.totalorder %s198, %s200
    %p204 = scmp.eq.s32.totalorder %s17, 0
    %p205 = por %p203, %p204
    %p206 = scmp.ne.s32.totalorder %s198, %s200
    %p207 = scmp.eq.s32.totalorder %s22, 1
    %p208 = por %p206, %p207
    %p209 = scmp.ne.s32.totalorder %s200, %s201
    %p210 = scmp.eq.s32.totalorder %s22, 0
    %p211 = por %p209, %p210
    %p212 = scmp.ne.s32.totalorder %s200, %s201
    %p213 = scmp.eq.s32.totalorder %s23, 1
    %p214 = por %p212, %p213
    %p216 = scmp.ne.s32.totalorder %s201, %s215
    %p217 = scmp.eq.s32.totalorder %s23, 0
    %p218 = por %p216, %p217
    %s220 = sadd.s32 %s219, 1
    %p223 = scmp.eq.s32.totalorder %s17, 1
    %p224 = scmp.ne.s32.totalorder %s219, %s221
    %p225 = scmp.eq.s32.totalorder %s17, 0
    %p226 = por %p224, %p225
    %p227 = scmp.ne.s32.totalorder %s219, %s221
    %p228 = scmp.eq.s32.totalorder %s22, 1
    %p229 = por %p227, %p228
    %p230 = scmp.ne.s32.totalorder %s221, %s222
    %p231 = scmp.eq.s32.totalorder %s22, 0
    %p232 = por %p230, %p231
    %p233 = scmp.ne.s32.totalorder %s221, %s222
    %p234 = scmp.eq.s32.totalorder %s23, 1
    %p235 = por %p233, %p234
    %p237 = scmp.ne.s32.totalorder %s222, %s236
    %p238 = scmp.eq.s32.totalorder %s23, 0
    %p239 = por %p237, %p238
    %s241 = sadd.s32 %s240, 1
    %p244 = scmp.eq.s32.totalorder %s17, 1
    %p245 = scmp.ne.s32.totalorder %s240, %s242
    %p246 = scmp.eq.s32.totalorder %s17, 0
    %p247 = por %p245, %p246
    %p248 = scmp.ne.s32.totalorder %s240, %s242
    %p249 = scmp.eq.s32.totalorder %s22, 1
    %p250 = por %p248, %p249
    %p251 = scmp.ne.s32.totalorder %s242, %s243
    %p252 = scmp.eq.s32.totalorder %s22, 0
    %p253 = por %p251, %p252
    %p254 = scmp.ne.s32.totalorder %s242, %s243
    %p255 = scmp.eq.s32.totalorder %s23, 1
    %p256 = por %p254, %p255
    %p258 = scmp.ne.s32.totalorder %s243, %s257
    %p259 = scmp.eq.s32.totalorder %s23, 0
    %p260 = por %p258, %p259
    %s261 = ssub.s32 %s17, %s24
    %p262 = scmp.eq.s32.totalorder %s261, 0
    %s264 = sadd.s32 %s263, 1
    %s265 = scalar_select %p262, %s263, %s264
    %p268 = pneg %p262
    %p269 = scmp.eq.s32.totalorder %s17, 1
    %p270 = por %p268, %p269
    %p271 = scmp.ne.s32.totalorder %s263, %s266
    %p272 = scmp.eq.s32.totalorder %s17, 0
    %p273 = por %p271, %p272
    %p274 = scmp.ne.s32.totalorder %s263, %s266
    %p275 = scmp.eq.s32.totalorder %s22, 1
    %p276 = por %p274, %p275
    %p277 = scmp.ne.s32.totalorder %s266, %s267
    %p278 = scmp.eq.s32.totalorder %s22, 0
    %p279 = por %p277, %p278
    %p280 = scmp.ne.s32.totalorder %s266, %s267
    %p281 = scmp.eq.s32.totalorder %s23, 1
    %p282 = por %p280, %p281
    %p284 = scmp.ne.s32.totalorder %s267, %s283
    %p285 = scmp.eq.s32.totalorder %s23, 0
    %p286 = por %p284, %p285
    %p287 = scmp.le.s32.totalorder 1, %s17
    %p288 = scmp.lt.s32.totalorder %s17, 3
    %p289 = pnand %p287, %p288
    %p290 = pneg %p289
    // Predicated region
    $region9: #{tpu_custom_call.1} parent=5 // pred_check
      _
    $region10: #{tpu_custom_call.1} parent=5 // pred_check_branch
      %292 = sbr.rel (%p289) target = $region12
    $region11: #{tpu_custom_call.1} parent=5 // pred_region
      %s293 = ssub.s32 %s17, 1
      // Predicated region
      $region13: #{tpu_custom_call.1} parent=11 // pred_check
        %p294 = pneg %p64
      $region14: #{tpu_custom_call.1} parent=11 // pred_check_branch
        %296 = sbr.rel (%p294) target = $region16
      $region15: #{tpu_custom_call.1} parent=11 // pred_region
        _
      $region16: #{tpu_custom_call.1} parent=11 // pred_fallthru
        _
      // Predicated region
      $region17: #{tpu_custom_call.1} parent=11 // pred_check
        %p297 = pneg %p85
      $region18: #{tpu_custom_call.1} parent=11 // pred_check_branch
        %299 = sbr.rel (%p297) target = $region20
      $region19: #{tpu_custom_call.1} parent=11 // pred_region
        _
      $region20: #{tpu_custom_call.1} parent=11 // pred_fallthru
        _
      // Predicated region
      $region21: #{tpu_custom_call.1} parent=11 // pred_check
        %p300 = pneg %p106
      $region22: #{tpu_custom_call.1} parent=11 // pred_check_branch
        %302 = sbr.rel (%p300) target = $region24
      $region23: #{tpu_custom_call.1} parent=11 // pred_region
        _
      $region24: #{tpu_custom_call.1} parent=11 // pred_fallthru
        _
      // Predicated region
      $region25: #{tpu_custom_call.1} parent=11 // pred_check
        %p303 = pneg %p127
      $region26: #{tpu_custom_call.1} parent=11 // pred_check_branch
        %305 = sbr.rel (%p303) target = $region28
      $region27: #{tpu_custom_call.1} parent=11 // pred_region
        _
      $region28: #{tpu_custom_call.1} parent=11 // pred_fallthru
        _
      // Predicated region
      $region29: #{tpu_custom_call.1} parent=11 // pred_check
        %p306 = pneg %p148
      $region30: #{tpu_custom_call.1} parent=11 // pred_check_branch
        %308 = sbr.rel (%p306) target = $region32
      $region31: #{tpu_custom_call.1} parent=11 // pred_region
        _
      $region32: #{tpu_custom_call.1} parent=11 // pred_fallthru
        _
      // Predicated region
      $region33: #{tpu_custom_call.1} parent=11 // pred_check
        %p309 = pneg %p169
      $region34: #{tpu_custom_call.1} parent=11 // pred_check_branch
        %311 = sbr.rel (%p309) target = $region36
      $region35: #{tpu_custom_call.1} parent=11 // pred_region
        _
      $region36: #{tpu_custom_call.1} parent=11 // pred_fallthru
        _
      // Predicated region
      $region37: #{tpu_custom_call.1} parent=11 // pred_check
        %p312 = pneg %p190
      $region38: #{tpu_custom_call.1} parent=11 // pred_check_branch
        %314 = sbr.rel (%p312) target = $region40
      $region39: #{tpu_custom_call.1} parent=11 // pred_region
        _
      $region40: #{tpu_custom_call.1} parent=11 // pred_fallthru
        _
      // Predicated region
      $region41: #{tpu_custom_call.1} parent=11 // pred_check
        %p315 = pneg %p211
      $region42: #{tpu_custom_call.1} parent=11 // pred_check_branch
        %317 = sbr.rel (%p315) target = $region44
      $region43: #{tpu_custom_call.1} parent=11 // pred_region
        _
      $region44: #{tpu_custom_call.1} parent=11 // pred_fallthru
        _
      // Predicated region
      $region45: #{tpu_custom_call.1} parent=11 // pred_check
        %p318 = pneg %p232
      $region46: #{tpu_custom_call.1} parent=11 // pred_check_branch
        %320 = sbr.rel (%p318) target = $region48
      $region47: #{tpu_custom_call.1} parent=11 // pred_region
        _
      $region48: #{tpu_custom_call.1} parent=11 // pred_fallthru
        _
      // Predicated region
      $region49: #{tpu_custom_call.1} parent=11 // pred_check
        %p321 = pneg %p253
      $region50: #{tpu_custom_call.1} parent=11 // pred_check_branch
        %323 = sbr.rel (%p321) target = $region52
      $region51: #{tpu_custom_call.1} parent=11 // pred_region
        _
      $region52: #{tpu_custom_call.1} parent=11 // pred_fallthru
        _
    $region12: #{tpu_custom_call.1} parent=5 // pred_fallthru
      _
    %p324 = scmp.lt.s32.totalorder %s17, 2
    // Predicated region
    $region53: #{tpu_custom_call.1} parent=5 // pred_check
      %p325 = pneg %p324
    $region54: #{tpu_custom_call.1} parent=5 // pred_check_branch
      %327 = sbr.rel (%p325) target = $region56
    $region55: #{tpu_custom_call.1} parent=5 // pred_region
      // Predicated region
      $region57: #{tpu_custom_call.1} parent=55 // pred_check
        %p328 = pneg %p37
      $region58: #{tpu_custom_call.1} parent=55 // pred_check_branch
        %330 = sbr.rel (%p328) target = $region60
      $region59: #{tpu_custom_call.1} parent=55 // pred_region
        %p331 = scmp.lt.s32.totalorder %s17, 1
        %s332 = scalar_select %p331, %s17, 1
        %s333 = smul.addr %s332, 32
        %s334 = smul.addr %s333, 8
        %s335 = scalar_lea.vmem %s0, %s334
      $region60: #{tpu_custom_call.1} parent=55 // pred_fallthru
        _
    $region56: #{tpu_custom_call.1} parent=5 // pred_fallthru
      _
    %p336 = scmp.le.s32.totalorder 1, %s17
    %p337 = scmp.lt.s32.totalorder %s17, 3
    %p338 = pnand %p336, %p337
    %p339 = pneg %p338
    // Predicated region
    $region61: #{tpu_custom_call.1} parent=5 // pred_check
      _
    $region62: #{tpu_custom_call.1} parent=5 // pred_check_branch
      %341 = sbr.rel (%p338) target = $region64
    $region63: #{tpu_custom_call.1} parent=5 // pred_region
      %s342 = ssub.s32 %s17, 1
      %p343 = scmp.lt.s32.totalorder %s22, 1
      %s344 = scalar_select %p343, %s22, 1
      %s345 = smul.addr %s344, 32
      %s346 = smul.addr %s345, 8
      %s347 = scalar_lea.vmem %s0, %s346
      %p348 = pneg %p43
      %p349 = pneg %p40
      %p350 = pneg %p64
      %p351 = pneg %p61
      %p352 = pneg %p85
      %p353 = pneg %p82
      %p354 = pneg %p106
      %p355 = pneg %p103
      %p356 = pneg %p127
      %p357 = pneg %p124
      %p358 = pneg %p148
      %p359 = pneg %p145
      %p360 = pneg %p169
      %p361 = pneg %p166
      %p362 = pneg %p190
      %p363 = pneg %p187
      %p364 = pneg %p211
      %p365 = pneg %p208
      %p366 = pneg %p232
      %p367 = pneg %p229
      %p368 = pneg %p253
      %p369 = pneg %p250
      %p370 = pneg %p279
      %p371 = pneg %p276
      %p372 = scmp.lt.s32.totalorder %s22, 1
      %s373 = scalar_select %p372, %s22, 1
      %s374 = smul.addr %s373, 32
      %s375 = smul.addr %s374, 8
      %s376 = scalar_lea.vmem %s11, %s375
      %p377 = scmp.lt.s32.totalorder %s22, 1
      %s378 = scalar_select %p377, %s22, 1
      %s379 = smul.addr %s378, 32
      %s380 = smul.addr %s379, 8
      %s381 = scalar_lea.vmem %s0, %s380
      %p382 = scmp.lt.s32.totalorder %s22, 1
      %s383 = scalar_select %p382, %s22, 1
      %s384 = smul.addr %s383, 32
      %s385 = smul.addr %s384, 8
      %s386 = scalar_lea.vmem %s11, %s385
      %v388 = vld [vmem:[%s381] sm:$0xff]
      %v389 = vld [vmem:[%s381 + $0x8] sm:$0xff]
      %v390 = vld [vmem:[%s381 + $0x10] sm:$0xff]
      %v391 = vld [vmem:[%s381 + $0x18] sm:$0xff]
      %v392 = vld [vmem:[%s381 + $0x20] sm:$0xff]
      %v393 = vld [vmem:[%s381 + $0x28] sm:$0xff]
      %v394 = vld [vmem:[%s381 + $0x30] sm:$0xff]
      %v395 = vld [vmem:[%s381 + $0x38] sm:$0xff]
      %v396 = vld [vmem:[%s381 + $0x40] sm:$0xff]
      %v397 = vld [vmem:[%s381 + $0x48] sm:$0xff]
      %v398 = vld [vmem:[%s381 + $0x50] sm:$0xff]
      %v399 = vld [vmem:[%s381 + $0x58] sm:$0xff]
      %v400 = vld [vmem:[%s381 + $0x60] sm:$0xff]
      %v401 = vld [vmem:[%s381 + $0x68] sm:$0xff]
      %v402 = vld [vmem:[%s381 + $0x70] sm:$0xff]
      %v403 = vld [vmem:[%s381 + $0x78] sm:$0xff]
      %v404 = vld [vmem:[%s381 + $0x80] sm:$0xff]
      %v405 = vld [vmem:[%s381 + $0x88] sm:$0xff]
      %v406 = vld [vmem:[%s381 + $0x90] sm:$0xff]
      %v407 = vld [vmem:[%s381 + $0x98] sm:$0xff]
      %v408 = vld [vmem:[%s381 + $0xa0] sm:$0xff]
      %v409 = vld [vmem:[%s381 + $0xa8] sm:$0xff]
      %v410 = vld [vmem:[%s381 + $0xb0] sm:$0xff]
      %v411 = vld [vmem:[%s381 + $0xb8] sm:$0xff]
      %v412 = vld [vmem:[%s381 + $0xc0] sm:$0xff]
      %v413 = vld [vmem:[%s381 + $0xc8] sm:$0xff]
      %v414 = vld [vmem:[%s381 + $0xd0] sm:$0xff]
      %v415 = vld [vmem:[%s381 + $0xd8] sm:$0xff]
      %v416 = vld [vmem:[%s381 + $0xe0] sm:$0xff]
      %v417 = vld [vmem:[%s381 + $0xe8] sm:$0xff]
      %v418 = vld [vmem:[%s381 + $0xf0] sm:$0xff]
      %v419 = vld [vmem:[%s381 + $0xf8] sm:$0xff]
      %v420 = vpack.c.bf16 %v389, %v388
      %v421 = vpack.c.bf16 %v391, %v390
      %v422 = vpack.c.bf16 %v393, %v392
      %v423 = vpack.c.bf16 %v395, %v394
      %v424 = vpack.c.bf16 %v397, %v396
      %v425 = vpack.c.bf16 %v399, %v398
      %v426 = vpack.c.bf16 %v401, %v400
      %v427 = vpack.c.bf16 %v403, %v402
      %v428 = vpack.c.bf16 %v405, %v404
      %v429 = vpack.c.bf16 %v407, %v406
      %v430 = vpack.c.bf16 %v409, %v408
      %v431 = vpack.c.bf16 %v411, %v410
      %v432 = vpack.c.bf16 %v413, %v412
      %v433 = vpack.c.bf16 %v415, %v414
      %v434 = vpack.c.bf16 %v417, %v416
      %v435 = vpack.c.bf16 %v419, %v418
      %v436 = vld [vmem:[%s1] sm:$0xff]
      %v437 = vpack.c.bf16 %v436, %v436
      %v438 = vld [vmem:[%s2] sm:$0x1]
      %v440 = vlaneseq
      %v441 = vshrl.u32 %v440, 7
      %v442 = vsub.s32 0, %v441
      %v443 = vrot.slane %v438, %v442
      %vm445 = vcmask 64512
      %v447 = vsel %vm445, %v420, 0
      %v450 = vsel %vm445, %v421, 0
      %v453 = vsel %vm445, %v422, 0
      %v456 = vsel %vm445, %v423, 0
      %v459 = vsel %vm445, %v424, 0
      %v462 = vsel %vm445, %v425, 0
      %v465 = vsel %vm445, %v426, 0
      %v468 = vsel %vm445, %v427, 0
      %v471 = vsel %vm445, %v428, 0
      %v474 = vsel %vm445, %v429, 0
      %v477 = vsel %vm445, %v430, 0
      %v480 = vsel %vm445, %v431, 0
      %v483 = vsel %vm445, %v432, 0
      %v486 = vsel %vm445, %v433, 0
      %v489 = vsel %vm445, %v434, 0
      %v492 = vsel %vm445, %v435, 0
      %vm494 = vcmask 1043456
      %v496 = vsel %vm494, %v437, 0
      %498 = vmatprep.subr.bf16.mxu0 0
      %499 = vmatpush1.bf16.msra.mxu0 %v496
      %500 = vmatprep.subr.bf16.mxu0 0
      %501 = vmatpush1.bf16.msra.mxu0 0
      %502 = vmatprep.subr.bf16.mxu0 0
      %503 = vmatpush1.bf16.msra.mxu0 0
      %504 = vmatprep.subr.bf16.mxu0 0
      %505 = vmatpush1.bf16.msra.mxu0 0
      %506 = vmatprep.subr.bf16.mxu0 0
      %507 = vmatpush1.bf16.msra.mxu0 0
      %508 = vmatprep.subr.bf16.mxu0 0
      %509 = vmatpush1.bf16.msra.mxu0 0
      %510 = vmatprep.subr.bf16.mxu0 0
      %511 = vmatpush1.bf16.msra.mxu0 0
      %512 = vmatprep.subr.bf16.mxu0 0
      %513 = vmatpush1.bf16.msra.mxu0 0
      %514 = vmatprep.subr.bf16.mxu0 0
      %515 = vmatpush1.bf16.msra.mxu0 0
      %516 = vmatprep.subr.bf16.mxu0 0
      %517 = vmatpush1.bf16.msra.mxu0 0
      %518 = vmatprep.subr.bf16.mxu0 0
      %519 = vmatpush1.bf16.msra.mxu0 0
      %520 = vmatprep.subr.bf16.mxu0 0
      %521 = vmatpush1.bf16.msra.mxu0 0
      %522 = vmatprep.subr.bf16.mxu0 0
      %523 = vmatpush1.bf16.msra.mxu0 0
      %524 = vmatprep.subr.bf16.mxu0 0
      %525 = vmatpush1.bf16.msra.mxu0 0
      %526 = vmatprep.subr.bf16.mxu0 0
      %527 = vmatpush1.bf16.msra.mxu0 0
      %528 = vmatprep.subr.bf16.mxu0 0
      %529 = vmatpush1.bf16.msra.mxu0 0
      %530 = vmatprep.mubr.bf16.mxu0 0
      %531 = vmatmul.mubr.bf16.gmra.mrb[0].mxu0 %v447
      %v532 = vpop.f32.mrb[0].mxu0
      %v533 = vadd.f32 %v443, %v532
      %v534 = vpop.f32.mrb[0].mxu0
      %v535 = vpop.f32.mrb[0].mxu0
      %v536 = vadd.f32 %v443, %v535
      %v537 = vpop.f32.mrb[0].mxu0
      %538 = vmatprep.mubr.bf16.mxu0 0
      %539 = vmatmul.mubr.bf16.gmra.mrb[0].mxu0 %v450
      %v540 = vpop.f32.mrb[0].mxu0
      %v541 = vadd.f32 %v443, %v540
      %v542 = vpop.f32.mrb[0].mxu0
      %v543 = vpop.f32.mrb[0].mxu0
      %v544 = vadd.f32 %v443, %v543
      %v545 = vpop.f32.mrb[0].mxu0
      %546 = vmatprep.mubr.bf16.mxu0 0
      %547 = vmatmul.mubr.bf16.gmra.mrb[0].mxu0 %v453
      %v548 = vpop.f32.mrb[0].mxu0
      %v549 = vadd.f32 %v443, %v548
      %v550 = vpop.f32.mrb[0].mxu0
      %v551 = vpop.f32.mrb[0].mxu0
      %v552 = vadd.f32 %v443, %v551
      %v553 = vpop.f32.mrb[0].mxu0
      %554 = vmatprep.mubr.bf16.mxu0 0
      %555 = vmatmul.mubr.bf16.gmra.mrb[0].mxu0 %v456
      %v556 = vpop.f32.mrb[0].mxu0
      %v557 = vadd.f32 %v443, %v556
      %v558 = vpop.f32.mrb[0].mxu0
      %v559 = vpop.f32.mrb[0].mxu0
      %v560 = vadd.f32 %v443, %v559
      %v561 = vpop.f32.mrb[0].mxu0
      %562 = vmatprep.mubr.bf16.mxu0 0
      %563 = vmatmul.mubr.bf16.gmra.mrb[0].mxu0 %v459
      %v564 = vpop.f32.mrb[0].mxu0
      %v565 = vadd.f32 %v443, %v564
      %v566 = vpop.f32.mrb[0].mxu0
      %v567 = vpop.f32.mrb[0].mxu0
      %v568 = vadd.f32 %v443, %v567
      %v569 = vpop.f32.mrb[0].mxu0
      %570 = vmatprep.mubr.bf16.mxu0 0
      %571 = vmatmul.mubr.bf16.gmra.mrb[0].mxu0 %v462
      %v572 = vpop.f32.mrb[0].mxu0
      %v573 = vadd.f32 %v443, %v572
      %v574 = vpop.f32.mrb[0].mxu0
      %v575 = vpop.f32.mrb[0].mxu0
      %v576 = vadd.f32 %v443, %v575
      %v577 = vpop.f32.mrb[0].mxu0
      %578 = vmatprep.mubr.bf16.mxu0 0
      %579 = vmatmul.mubr.bf16.gmra.mrb[0].mxu0 %v465
      %v580 = vpop.f32.mrb[0].mxu0
      %v581 = vadd.f32 %v443, %v580
      %v582 = vpop.f32.mrb[0].mxu0
      %v583 = vpop.f32.mrb[0].mxu0
      %v584 = vadd.f32 %v443, %v583
      %v585 = vpop.f32.mrb[0].mxu0
      %586 = vmatprep.mubr.bf16.mxu0 0
      %587 = vmatmul.mubr.bf16.gmra.mrb[0].mxu0 %v468
      %v588 = vpop.f32.mrb[0].mxu0
      %v589 = vadd.f32 %v443, %v588
      %v590 = vpop.f32.mrb[0].mxu0
      %v591 = vpop.f32.mrb[0].mxu0
      %v592 = vadd.f32 %v443, %v591
      %v593 = vpop.f32.mrb[0].mxu0
      %594 = vmatprep.mubr.bf16.mxu0 0
      %595 = vmatmul.mubr.bf16.gmra.mrb[0].mxu0 %v471
      %v596 = vpop.f32.mrb[0].mxu0
      %v597 = vadd.f32 %v443, %v596
      %v598 = vpop.f32.mrb[0].mxu0
      %v599 = vpop.f32.mrb[0].mxu0
      %v600 = vadd.f32 %v443, %v599
      %v601 = vpop.f32.mrb[0].mxu0
      %602 = vmatprep.mubr.bf16.mxu0 0
      %603 = vmatmul.mubr.bf16.gmra.mrb[0].mxu0 %v474
      %v604 = vpop.f32.mrb[0].mxu0
      %v605 = vadd.f32 %v443, %v604
      %v606 = vpop.f32.mrb[0].mxu0
      %v607 = vpop.f32.mrb[0].mxu0
      %v608 = vadd.f32 %v443, %v607
      %v609 = vpop.f32.mrb[0].mxu0
      %610 = vmatprep.mubr.bf16.mxu0 0
      %611 = vmatmul.mubr.bf16.gmra.mrb[0].mxu0 %v477
      %v612 = vpop.f32.mrb[0].mxu0
      %v613 = vadd.f32 %v443, %v612
      %v614 = vpop.f32.mrb[0].mxu0
      %v615 = vpop.f32.mrb[0].mxu0
      %v616 = vadd.f32 %v443, %v615
      %v617 = vpop.f32.mrb[0].mxu0
      %618 = vmatprep.mubr.bf16.mxu0 0
      %619 = vmatmul.mubr.bf16.gmra.mrb[0].mxu0 %v480
      %v620 = vpop.f32.mrb[0].mxu0
      %v621 = vadd.f32 %v443, %v620
      %v622 = vpop.f32.mrb[0].mxu0
      %v623 = vpop.f32.mrb[0].mxu0
      %v624 = vadd.f32 %v443, %v623
      %v625 = vpop.f32.mrb[0].mxu0
      %626 = vmatprep.mubr.bf16.mxu0 0
      %627 = vmatmul.mubr.bf16.gmra.mrb[0].mxu0 %v483
      %v628 = vpop.f32.mrb[0].mxu0
      %v629 = vadd.f32 %v443, %v628
      %v630 = vpop.f32.mrb[0].mxu0
      %v631 = vpop.f32.mrb[0].mxu0
      %v632 = vadd.f32 %v443, %v631
      %v633 = vpop.f32.mrb[0].mxu0
      %634 = vmatprep.mubr.bf16.mxu0 0
      %635 = vmatmul.mubr.bf16.gmra.mrb[0].mxu0 %v486
      %v636 = vpop.f32.mrb[0].mxu0
      %v637 = vadd.f32 %v443, %v636
      %v638 = vpop.f32.mrb[0].mxu0
      %v639 = vpop.f32.mrb[0].mxu0
      %v640 = vadd.f32 %v443, %v639
      %v641 = vpop.f32.mrb[0].mxu0
      %642 = vmatprep.mubr.bf16.mxu0 0
      %643 = vmatmul.mubr.bf16.gmra.mrb[0].mxu0 %v489
      %v644 = vpop.f32.mrb[0].mxu0
      %v645 = vadd.f32 %v443, %v644
      %v646 = vpop.f32.mrb[0].mxu0
      %v647 = vpop.f32.mrb[0].mxu0
      %v648 = vadd.f32 %v443, %v647
      %v649 = vpop.f32.mrb[0].mxu0
      %650 = vmatprep.mubr.bf16.mxu0 0
      %651 = vmatmul.mubr.bf16.gmra.mrb[0].mxu0 %v492
      %v652 = vpop.f32.mrb[0].mxu0
      %v653 = vadd.f32 %v443, %v652
      %v654 = vpop.f32.mrb[0].mxu0
      %v655 = vpop.f32.mrb[0].mxu0
      %v656 = vadd.f32 %v443, %v655
      %v657 = vpop.f32.mrb[0].mxu0
      %658 = vdwg.mxu0
      %v659 = vadd.f32 %v533, 3.0
      %v660 = vadd.f32 %v536, 3.0
      %v661 = vadd.f32 %v541, 3.0
      %v662 = vadd.f32 %v544, 3.0
      %v663 = vadd.f32 %v549, 3.0
      %v664 = vadd.f32 %v552, 3.0
      %v665 = vadd.f32 %v557, 3.0
      %v666 = vadd.f32 %v560, 3.0
      %v667 = vadd.f32 %v565, 3.0
      %v668 = vadd.f32 %v568, 3.0
      %v669 = vadd.f32 %v573, 3.0
      %v670 = vadd.f32 %v576, 3.0
      %v671 = vadd.f32 %v581, 3.0
      %v672 = vadd.f32 %v584, 3.0
      %v673 = vadd.f32 %v589, 3.0
      %v674 = vadd.f32 %v592, 3.0
      %v675 = vadd.f32 %v597, 3.0
      %v676 = vadd.f32 %v600, 3.0
      %v677 = vadd.f32 %v605, 3.0
      %v678 = vadd.f32 %v608, 3.0
      %v679 = vadd.f32 %v613, 3.0
      %v680 = vadd.f32 %v616, 3.0
      %v681 = vadd.f32 %v621, 3.0
      %v682 = vadd.f32 %v624, 3.0
      %v683 = vadd.f32 %v629, 3.0
      %v684 = vadd.f32 %v632, 3.0
      %v685 = vadd.f32 %v637, 3.0
      %v686 = vadd.f32 %v640, 3.0
      %v687 = vadd.f32 %v645, 3.0
      %v688 = vadd.f32 %v648, 3.0
      %v689 = vadd.f32 %v653, 3.0
      %v690 = vadd.f32 %v656, 3.0
      %v691 = vmax.f32 %v659, 0.0
      %v692 = vmax.f32 %v660, 0.0
      %v693 = vmax.f32 %v661, 0.0
      %v694 = vmax.f32 %v662, 0.0
      %v695 = vmax.f32 %v663, 0.0
      %v696 = vmax.f32 %v664, 0.0
      %v697 = vmax.f32 %v665, 0.0
      %v698 = vmax.f32 %v666, 0.0
      %v699 = vmax.f32 %v667, 0.0
      %v700 = vmax.f32 %v668, 0.0
      %v701 = vmax.f32 %v669, 0.0
      %v702 = vmax.f32 %v670, 0.0
      %v703 = vmax.f32 %v671, 0.0
      %v704 = vmax.f32 %v672, 0.0
      %v705 = vmax.f32 %v673, 0.0
      %v706 = vmax.f32 %v674, 0.0
      %v707 = vmax.f32 %v675, 0.0
      %v708 = vmax.f32 %v676, 0.0
      %v709 = vmax.f32 %v677, 0.0
      %v710 = vmax.f32 %v678, 0.0
      %v711 = vmax.f32 %v679, 0.0
      %v712 = vmax.f32 %v680, 0.0
      %v713 = vmax.f32 %v681, 0.0
      %v714 = vmax.f32 %v682, 0.0
      %v715 = vmax.f32 %v683, 0.0
      %v716 = vmax.f32 %v684, 0.0
      %v717 = vmax.f32 %v685, 0.0
      %v718 = vmax.f32 %v686, 0.0
      %v719 = vmax.f32 %v687, 0.0
      %v720 = vmax.f32 %v688, 0.0
      %v721 = vmax.f32 %v689, 0.0
      %v722 = vmax.f32 %v690, 0.0
      %v723 = vmin.f32 %v691, 6.0
      %v724 = vmin.f32 %v692, 6.0
      %v725 = vmin.f32 %v693, 6.0
      %v726 = vmin.f32 %v694, 6.0
      %v727 = vmin.f32 %v695, 6.0
      %v728 = vmin.f32 %v696, 6.0
      %v729 = vmin.f32 %v697, 6.0
      %v730 = vmin.f32 %v698, 6.0
      %v731 = vmin.f32 %v699, 6.0
      %v732 = vmin.f32 %v700, 6.0
      %v733 = vmin.f32 %v701, 6.0
      %v734 = vmin.f32 %v702, 6.0
      %v735 = vmin.f32 %v703, 6.0
      %v736 = vmin.f32 %v704, 6.0
      %v737 = vmin.f32 %v705, 6.0
      %v738 = vmin.f32 %v706, 6.0
      %v739 = vmin.f32 %v707, 6.0
      %v740 = vmin.f32 %v708, 6.0
      %v741 = vmin.f32 %v709, 6.0
      %v742 = vmin.f32 %v710, 6.0
      %v743 = vmin.f32 %v711, 6.0
      %v744 = vmin.f32 %v712, 6.0
      %v745 = vmin.f32 %v713, 6.0
      %v746 = vmin.f32 %v714, 6.0
      %v747 = vmin.f32 %v715, 6.0
      %v748 = vmin.f32 %v716, 6.0
      %v749 = vmin.f32 %v717, 6.0
      %v750 = vmin.f32 %v718, 6.0
      %v751 = vmin.f32 %v719, 6.0
      %v752 = vmin.f32 %v720, 6.0
      %v753 = vmin.f32 %v721, 6.0
      %v754 = vmin.f32 %v722, 6.0
      %v755 = vmul.f32 %v533, %v723
      %v756 = vmul.f32 %v536, %v724
      %v757 = vmul.f32 %v541, %v725
      %v758 = vmul.f32 %v544, %v726
      %v759 = vmul.f32 %v549, %v727
      %v760 = vmul.f32 %v552, %v728
      %v761 = vmul.f32 %v557, %v729
      %v762 = vmul.f32 %v560, %v730
      %v763 = vmul.f32 %v565, %v731
      %v764 = vmul.f32 %v568, %v732
      %v765 = vmul.f32 %v573, %v733
      %v766 = vmul.f32 %v576, %v734
      %v767 = vmul.f32 %v581, %v735
      %v768 = vmul.f32 %v584, %v736
      %v769 = vmul.f32 %v589, %v737
      %v770 = vmul.f32 %v592, %v738
      %v771 = vmul.f32 %v597, %v739
      %v772 = vmul.f32 %v600, %v740
      %v773 = vmul.f32 %v605, %v741
      %v774 = vmul.f32 %v608, %v742
      %v775 = vmul.f32 %v613, %v743
      %v776 = vmul.f32 %v616, %v744
      %v777 = vmul.f32 %v621, %v745
      %v778 = vmul.f32 %v624, %v746
      %v779 = vmul.f32 %v629, %v747
      %v780 = vmul.f32 %v632, %v748
      %v781 = vmul.f32 %v637, %v749
      %v782 = vmul.f32 %v640, %v750
      %v783 = vmul.f32 %v645, %v751
      %v784 = vmul.f32 %v648, %v752
      %v785 = vmul.f32 %v653, %v753
      %v786 = vmul.f32 %v656, %v754
      %v787 = vmul.f32 %v755, 0.16666667
      %v788 = vmul.f32 %v756, 0.16666667
      %v789 = vmul.f32 %v757, 0.16666667
      %v790 = vmul.f32 %v758, 0.16666667
      %v791 = vmul.f32 %v759, 0.16666667
      %v792 = vmul.f32 %v760, 0.16666667
      %v793 = vmul.f32 %v761, 0.16666667
      %v794 = vmul.f32 %v762, 0.16666667
      %v795 = vmul.f32 %v763, 0.16666667
      %v796 = vmul.f32 %v764, 0.16666667
      %v797 = vmul.f32 %v765, 0.16666667
      %v798 = vmul.f32 %v766, 0.16666667
      %v799 = vmul.f32 %v767, 0.16666667
      %v800 = vmul.f32 %v768, 0.16666667
      %v801 = vmul.f32 %v769, 0.16666667
      %v802 = vmul.f32 %v770, 0.16666667
      %v803 = vmul.f32 %v771, 0.16666667
      %v804 = vmul.f32 %v772, 0.16666667
      %v805 = vmul.f32 %v773, 0.16666667
      %v806 = vmul.f32 %v774, 0.16666667
      %v807 = vmul.f32 %v775, 0.16666667
      %v808 = vmul.f32 %v776, 0.16666667
      %v809 = vmul.f32 %v777, 0.16666667
      %v810 = vmul.f32 %v778, 0.16666667
      %v811 = vmul.f32 %v779, 0.16666667
      %v812 = vmul.f32 %v780, 0.16666667
      %v813 = vmul.f32 %v781, 0.16666667
      %v814 = vmul.f32 %v782, 0.16666667
      %v815 = vmul.f32 %v783, 0.16666667
      %v816 = vmul.f32 %v784, 0.16666667
      %v817 = vmul.f32 %v785, 0.16666667
      %v818 = vmul.f32 %v786, 0.16666667
      %v819 = vlaneseq
      %v820 = vshrl.u32 %v819, 7
      %v821 = vadd.s32 %v820, 8
      %v822 = vrot.slane %v787, 7
      %v823 = vrot.slane %v789, 7
      %v824 = vrot.slane %v791, 7
      %v825 = vrot.slane %v793, 7
      %v826 = vrot.slane %v795, 7
      %v827 = vrot.slane %v797, 7
      %v828 = vrot.slane %v799, 7
      %v829 = vrot.slane %v801, 7
      %v830 = vrot.slane %v803, 7
      %v831 = vrot.slane %v805, 7
      %v832 = vrot.slane %v807, 7
      %v833 = vrot.slane %v809, 7
      %v834 = vrot.slane %v811, 7
      %v835 = vrot.slane %v813, 7
      %v836 = vrot.slane %v815, 7
      %v837 = vrot.slane %v817, 7
      %v838 = vrot.slane %v788, 7
      %v839 = vrot.slane %v790, 7
      %v840 = vrot.slane %v792, 7
      %v841 = vrot.slane %v794, 7
      %v842 = vrot.slane %v796, 7
      %v843 = vrot.slane %v798, 7
      %v844 = vrot.slane %v800, 7
      %v845 = vrot.slane %v802, 7
      %v846 = vrot.slane %v804, 7
      %v847 = vrot.slane %v806, 7
      %v848 = vrot.slane %v808, 7
      %v849 = vrot.slane %v810, 7
      %v850 = vrot.slane %v812, 7
      %v851 = vrot.slane %v814, 7
      %v852 = vrot.slane %v816, 7
      %v853 = vrot.slane %v818, 7
      %vm854 = vcmp.lt.s32.totalorder %v820, 1
      %v855 = vsel %vm854, %v822, %v838
      %v856 = vsel %vm854, %v823, %v839
      %v857 = vsel %vm854, %v824, %v840
      %v858 = vsel %vm854, %v825, %v841
      %v859 = vsel %vm854, %v826, %v842
      %v860 = vsel %vm854, %v827, %v843
      %v861 = vsel %vm854, %v828, %v844
      %v862 = vsel %vm854, %v829, %v845
      %v863 = vsel %vm854, %v830, %v846
      %v864 = vsel %vm854, %v831, %v847
      %v865 = vsel %vm854, %v832, %v848
      %v866 = vsel %vm854, %v833, %v849
      %v867 = vsel %vm854, %v834, %v850
      %v868 = vsel %vm854, %v835, %v851
      %v869 = vsel %vm854, %v836, %v852
      %v870 = vsel %vm854, %v837, %v853
      %v871 = vsel %vm854, %v838, %v822
      %v872 = vsel %vm854, %v839, %v823
      %v873 = vsel %vm854, %v840, %v824
      %v874 = vsel %vm854, %v841, %v825
      %v875 = vsel %vm854, %v842, %v826
      %v876 = vsel %vm854, %v843, %v827
      %v877 = vsel %vm854, %v844, %v828
      %v878 = vsel %vm854, %v845, %v829
      %v879 = vsel %vm854, %v846, %v830
      %v880 = vsel %vm854, %v847, %v831
      %v881 = vsel %vm854, %v848, %v832
      %v882 = vsel %vm854, %v849, %v833
      %v883 = vsel %vm854, %v850, %v834
      %v884 = vsel %vm854, %v851, %v835
      %v885 = vsel %vm854, %v852, %v836
      %v886 = vsel %vm854, %v853, %v837
      %v887 = vadd.s32 %v820, 4294967295
      %v888 = vadd.s32 %v821, 4294967295
      %vm889 = vcmp.ge.s32.totalorder %v887, 0
      %vm890 = vcmp.ge.s32.totalorder %v888, 0
      %vm891 = vcmp.lt.s32.totalorder %v887, 16
      %vm892 = vcmp.lt.s32.totalorder %v888, 16
      %vm893 = vmand %vm889, %vm891
      %vm894 = vmand %vm890, %vm892
      %v895 = vsel %vm893, 1, 0
      %v896 = vsel %vm894, 1, 0
      %vm897 = vcmp.eq.s32.totalorder %v895, 1
      %vm898 = vcmp.eq.s32.totalorder %v896, 1
      %v899 = vsel %vm897, %v871, 0.0
      %v900 = vsel %vm898, %v855, 0.0
      %v901 = vsel %vm897, %v872, 0.0
      %v902 = vsel %vm898, %v856, 0.0
      %v903 = vsel %vm897, %v873, 0.0
      %v904 = vsel %vm898, %v857, 0.0
      %v905 = vsel %vm897, %v874, 0.0
      %v906 = vsel %vm898, %v858, 0.0
      %v907 = vsel %vm897, %v875, 0.0
      %v908 = vsel %vm898, %v859, 0.0
      %v909 = vsel %vm897, %v876, 0.0
      %v910 = vsel %vm898, %v860, 0.0
      %v911 = vsel %vm897, %v877, 0.0
      %v912 = vsel %vm898, %v861, 0.0
      %v913 = vsel %vm897, %v878, 0.0
      %v914 = vsel %vm898, %v862, 0.0
      %v915 = vsel %vm897, %v879, 0.0
      %v916 = vsel %vm898, %v863, 0.0
      %v917 = vsel %vm897, %v880, 0.0
      %v918 = vsel %vm898, %v864, 0.0
      %v919 = vsel %vm897, %v881, 0.0
      %v920 = vsel %vm898, %v865, 0.0
      %v921 = vsel %vm897, %v882, 0.0
      %v922 = vsel %vm898, %v866, 0.0
      %v923 = vsel %vm897, %v883, 0.0
      %v924 = vsel %vm898, %v867, 0.0
      %v925 = vsel %vm897, %v884, 0.0
      %v926 = vsel %vm898, %v868, 0.0
      %v927 = vsel %vm897, %v885, 0.0
      %v928 = vsel %vm898, %v869, 0.0
      %v929 = vsel %vm897, %v886, 0.0
      %v930 = vsel %vm898, %v870, 0.0
      %v931 = vrot.slane %v787, 1
      %v932 = vrot.slane %v789, 1
      %v933 = vrot.slane %v791, 1
      %v934 = vrot.slane %v793, 1
      %v935 = vrot.slane %v795, 1
      %v936 = vrot.slane %v797, 1
      %v937 = vrot.slane %v799, 1
      %v938 = vrot.slane %v801, 1
      %v939 = vrot.slane %v803, 1
      %v940 = vrot.slane %v805, 1
      %v941 = vrot.slane %v807, 1
      %v942 = vrot.slane %v809, 1
      %v943 = vrot.slane %v811, 1
      %v944 = vrot.slane %v813, 1
      %v945 = vrot.slane %v815, 1
      %v946 = vrot.slane %v817, 1
      %v947 = vrot.slane %v788, 1
      %v948 = vrot.slane %v790, 1
      %v949 = vrot.slane %v792, 1
      %v950 = vrot.slane %v794, 1
      %v951 = vrot.slane %v796, 1
      %v952 = vrot.slane %v798, 1
      %v953 = vrot.slane %v800, 1
      %v954 = vrot.slane %v802, 1
      %v955 = vrot.slane %v804, 1
      %v956 = vrot.slane %v806, 1
      %v957 = vrot.slane %v808, 1
      %v958 = vrot.slane %v810, 1
      %v959 = vrot.slane %v812, 1
      %v960 = vrot.slane %v814, 1
      %v961 = vrot.slane %v816, 1
      %v962 = vrot.slane %v818, 1
      %vm963 = vcmp.lt.s32.totalorder %v820, 7
      %v964 = vsel %vm963, %v931, %v947
      %v965 = vsel %vm963, %v932, %v948
      %v966 = vsel %vm963, %v933, %v949
      %v967 = vsel %vm963, %v934, %v950
      %v968 = vsel %vm963, %v935, %v951
      %v969 = vsel %vm963, %v936, %v952
      %v970 = vsel %vm963, %v937, %v953
      %v971 = vsel %vm963, %v938, %v954
      %v972 = vsel %vm963, %v939, %v955
      %v973 = vsel %vm963, %v940, %v956
      %v974 = vsel %vm963, %v941, %v957
      %v975 = vsel %vm963, %v942, %v958
      %v976 = vsel %vm963, %v943, %v959
      %v977 = vsel %vm963, %v944, %v960
      %v978 = vsel %vm963, %v945, %v961
      %v979 = vsel %vm963, %v946, %v962
      %v980 = vsel %vm963, %v947, %v931
      %v981 = vsel %vm963, %v948, %v932
      %v982 = vsel %vm963, %v949, %v933
      %v983 = vsel %vm963, %v950, %v934
      %v984 = vsel %vm963, %v951, %v935
      %v985 = vsel %vm963, %v952, %v936
      %v986 = vsel %vm963, %v953, %v937
      %v987 = vsel %vm963, %v954, %v938
      %v988 = vsel %vm963, %v955, %v939
      %v989 = vsel %vm963, %v956, %v940
      %v990 = vsel %vm963, %v957, %v941
      %v991 = vsel %vm963, %v958, %v942
      %v992 = vsel %vm963, %v959, %v943
      %v993 = vsel %vm963, %v960, %v944
      %v994 = vsel %vm963, %v961, %v945
      %v995 = vsel %vm963, %v962, %v946
      %v996 = vadd.s32 %v820, 1
      %v997 = vadd.s32 %v821, 1
      %vm998 = vcmp.ge.s32.totalorder %v996, 0
      %vm999 = vcmp.ge.s32.totalorder %v997, 0
      %vm1000 = vcmp.lt.s32.totalorder %v996, 16
      %vm1001 = vcmp.lt.s32.totalorder %v997, 16
      %vm1002 = vmand %vm998, %vm1000
      %vm1003 = vmand %vm999, %vm1001
      %v1004 = vsel %vm1002, 1, 0
      %v1005 = vsel %vm1003, 1, 0
      %vm1006 = vcmp.eq.s32.totalorder %v1004, 1
      %vm1007 = vcmp.eq.s32.totalorder %v1005, 1
      %v1008 = vsel %vm1006, %v964, 0.0
      %v1009 = vsel %vm1007, %v980, 0.0
      %v1010 = vsel %vm1006, %v965, 0.0
      %v1011 = vsel %vm1007, %v981, 0.0
      %v1012 = vsel %vm1006, %v966, 0.0
      %v1013 = vsel %vm1007, %v982, 0.0
      %v1014 = vsel %vm1006, %v967, 0.0
      %v1015 = vsel %vm1007, %v983, 0.0
      %v1016 = vsel %vm1006, %v968, 0.0
      %v1017 = vsel %vm1007, %v984, 0.0
      %v1018 = vsel %vm1006, %v969, 0.0
      %v1019 = vsel %vm1007, %v985, 0.0
      %v1020 = vsel %vm1006, %v970, 0.0
      %v1021 = vsel %vm1007, %v986, 0.0
      %v1022 = vsel %vm1006, %v971, 0.0
      %v1023 = vsel %vm1007, %v987, 0.0
      %v1024 = vsel %vm1006, %v972, 0.0
      %v1025 = vsel %vm1007, %v988, 0.0
      %v1026 = vsel %vm1006, %v973, 0.0
      %v1027 = vsel %vm1007, %v989, 0.0
      %v1028 = vsel %vm1006, %v974, 0.0
      %v1029 = vsel %vm1007, %v990, 0.0
      %v1030 = vsel %vm1006, %v975, 0.0
      %v1031 = vsel %vm1007, %v991, 0.0
      %v1032 = vsel %vm1006, %v976, 0.0
      %v1033 = vsel %vm1007, %v992, 0.0
      %v1034 = vsel %vm1006, %v977, 0.0
      %v1035 = vsel %vm1007, %v993, 0.0
      %v1036 = vsel %vm1006, %v978, 0.0
      %v1037 = vsel %vm1007, %v994, 0.0
      %v1038 = vsel %vm1006, %v979, 0.0
      %v1039 = vsel %vm1007, %v995, 0.0
      %v1040 = vld [vmem:[%s3] sm:$0x1]
      %v1041 = vld [vmem:[%s3 + $0x1] sm:$0x1]
      %v1042 = vld [vmem:[%s3 + $0x2] sm:$0x1]
      %v1043 = vld [vmem:[%s3 + $0x3] sm:$0x1]
      %v1044 = vld [vmem:[%s3 + $0x4] sm:$0x1]
      %v1045 = vld [vmem:[%s3 + $0x5] sm:$0x1]
      %v1046 = vld [vmem:[%s3 + $0x6] sm:$0x1]
      %v1047 = vld [vmem:[%s3 + $0x7] sm:$0x1]
      %v1048 = vld [vmem:[%s3 + $0x8] sm:$0x1]
      %v1049 = vlaneseq
      %v1050 = vshrl.u32 %v1049, 7
      %v1051 = vsub.s32 0, %v1050
      %v1052 = vrot.slane %v1040, %v1051
      %v1053 = vmul.f32 %v899, %v1052
      %v1054 = vmul.f32 %v900, %v1052
      %v1055 = vmul.f32 %v901, %v1052
      %v1056 = vmul.f32 %v902, %v1052
      %v1057 = vmul.f32 %v903, %v1052
      %v1058 = vmul.f32 %v904, %v1052
      %v1059 = vmul.f32 %v905, %v1052
      %v1060 = vmul.f32 %v906, %v1052
      %v1061 = vmul.f32 %v907, %v1052
      %v1062 = vmul.f32 %v908, %v1052
      %v1063 = vmul.f32 %v909, %v1052
      %v1064 = vmul.f32 %v910, %v1052
      %v1065 = vmul.f32 %v911, %v1052
      %v1066 = vmul.f32 %v912, %v1052
      %v1067 = vmul.f32 %v913, %v1052
      %v1068 = vmul.f32 %v914, %v1052
      %v1069 = vmul.f32 %v915, %v1052
      %v1070 = vmul.f32 %v916, %v1052
      %v1071 = vmul.f32 %v917, %v1052
      %v1072 = vmul.f32 %v918, %v1052
      %v1073 = vmul.f32 %v919, %v1052
      %v1074 = vmul.f32 %v920, %v1052
      %v1075 = vmul.f32 %v921, %v1052
      %v1076 = vmul.f32 %v922, %v1052
      %v1077 = vmul.f32 %v923, %v1052
      %v1078 = vmul.f32 %v924, %v1052
      %v1079 = vmul.f32 %v925, %v1052
      %v1080 = vmul.f32 %v926, %v1052
      %v1081 = vmul.f32 %v927, %v1052
      %v1082 = vmul.f32 %v928, %v1052
      %v1083 = vlaneseq
      %v1084 = vshrl.u32 %v1083, 7
      %v1085 = vsub.s32 0, %v1084
      %v1086 = vrot.slane %v1041, %v1085
      %v1087 = vmul.f32 %v787, %v1086
      %v1088 = vmul.f32 %v788, %v1086
      %v1089 = vmul.f32 %v789, %v1086
      %v1090 = vmul.f32 %v790, %v1086
      %v1091 = vmul.f32 %v791, %v1086
      %v1092 = vmul.f32 %v792, %v1086
      %v1093 = vmul.f32 %v793, %v1086
      %v1094 = vmul.f32 %v794, %v1086
      %v1095 = vmul.f32 %v795, %v1086
      %v1096 = vmul.f32 %v796, %v1086
      %v1097 = vmul.f32 %v797, %v1086
      %v1098 = vmul.f32 %v798, %v1086
      %v1099 = vmul.f32 %v799, %v1086
      %v1100 = vmul.f32 %v800, %v1086
      %v1101 = vmul.f32 %v801, %v1086
      %v1102 = vmul.f32 %v802, %v1086
      %v1103 = vmul.f32 %v803, %v1086
      %v1104 = vmul.f32 %v804, %v1086
      %v1105 = vmul.f32 %v805, %v1086
      %v1106 = vmul.f32 %v806, %v1086
      %v1107 = vmul.f32 %v807, %v1086
      %v1108 = vmul.f32 %v808, %v1086
      %v1109 = vmul.f32 %v809, %v1086
      %v1110 = vmul.f32 %v810, %v1086
      %v1111 = vmul.f32 %v811, %v1086
      %v1112 = vmul.f32 %v812, %v1086
      %v1113 = vmul.f32 %v813, %v1086
      %v1114 = vmul.f32 %v814, %v1086
      %v1115 = vmul.f32 %v815, %v1086
      %v1116 = vmul.f32 %v816, %v1086
      %v1117 = vadd.f32 %v1053, %v1087
      %v1118 = vadd.f32 %v1054, %v1088
      %v1119 = vadd.f32 %v1055, %v1089
      %v1120 = vadd.f32 %v1056, %v1090
      %v1121 = vadd.f32 %v1057, %v1091
      %v1122 = vadd.f32 %v1058, %v1092
      %v1123 = vadd.f32 %v1059, %v1093
      %v1124 = vadd.f32 %v1060, %v1094
      %v1125 = vadd.f32 %v1061, %v1095
      %v1126 = vadd.f32 %v1062, %v1096
      %v1127 = vadd.f32 %v1063, %v1097
      %v1128 = vadd.f32 %v1064, %v1098
      %v1129 = vadd.f32 %v1065, %v1099
      %v1130 = vadd.f32 %v1066, %v1100
      %v1131 = vadd.f32 %v1067, %v1101
      %v1132 = vadd.f32 %v1068, %v1102
      %v1133 = vadd.f32 %v1069, %v1103
      %v1134 = vadd.f32 %v1070, %v1104
      %v1135 = vadd.f32 %v1071, %v1105
      %v1136 = vadd.f32 %v1072, %v1106
      %v1137 = vadd.f32 %v1073, %v1107
      %v1138 = vadd.f32 %v1074, %v1108
      %v1139 = vadd.f32 %v1075, %v1109
      %v1140 = vadd.f32 %v1076, %v1110
      %v1141 = vadd.f32 %v1077, %v1111
      %v1142 = vadd.f32 %v1078, %v1112
      %v1143 = vadd.f32 %v1079, %v1113
      %v1144 = vadd.f32 %v1080, %v1114
      %v1145 = vadd.f32 %v1081, %v1115
      %v1146 = vadd.f32 %v1082, %v1116
      %v1147 = vlaneseq
      %v1148 = vshrl.u32 %v1147, 7
      %v1149 = vsub.s32 0, %v1148
      %v1150 = vrot.slane %v1042, %v1149
      %v1151 = vmul.f32 %v1008, %v1150
      %v1152 = vmul.f32 %v1009, %v1150
      %v1153 = vmul.f32 %v1010, %v1150
      %v1154 = vmul.f32 %v1011, %v1150
      %v1155 = vmul.f32 %v1012, %v1150
      %v1156 = vmul.f32 %v1013, %v1150
      %v1157 = vmul.f32 %v1014, %v1150
      %v1158 = vmul.f32 %v1015, %v1150
      %v1159 = vmul.f32 %v1016, %v1150
      %v1160 = vmul.f32 %v1017, %v1150
      %v1161 = vmul.f32 %v1018, %v1150
      %v1162 = vmul.f32 %v1019, %v1150
      %v1163 = vmul.f32 %v1020, %v1150
      %v1164 = vmul.f32 %v1021, %v1150
      %v1165 = vmul.f32 %v1022, %v1150
      %v1166 = vmul.f32 %v1023, %v1150
      %v1167 = vmul.f32 %v1024, %v1150
      %v1168 = vmul.f32 %v1025, %v1150
      %v1169 = vmul.f32 %v1026, %v1150
      %v1170 = vmul.f32 %v1027, %v1150
      %v1171 = vmul.f32 %v1028, %v1150
      %v1172 = vmul.f32 %v1029, %v1150
      %v1173 = vmul.f32 %v1030, %v1150
      %v1174 = vmul.f32 %v1031, %v1150
      %v1175 = vmul.f32 %v1032, %v1150
      %v1176 = vmul.f32 %v1033, %v1150
      %v1177 = vmul.f32 %v1034, %v1150
      %v1178 = vmul.f32 %v1035, %v1150
      %v1179 = vmul.f32 %v1036, %v1150
      %v1180 = vmul.f32 %v1037, %v1150
      %v1181 = vadd.f32 %v1117, %v1151
      %v1182 = vadd.f32 %v1118, %v1152
      %v1183 = vadd.f32 %v1119, %v1153
      %v1184 = vadd.f32 %v1120, %v1154
      %v1185 = vadd.f32 %v1121, %v1155
      %v1186 = vadd.f32 %v1122, %v1156
      %v1187 = vadd.f32 %v1123, %v1157
      %v1188 = vadd.f32 %v1124, %v1158
      %v1189 = vadd.f32 %v1125, %v1159
      %v1190 = vadd.f32 %v1126, %v1160
      %v1191 = vadd.f32 %v1127, %v1161
      %v1192 = vadd.f32 %v1128, %v1162
      %v1193 = vadd.f32 %v1129, %v1163
      %v1194 = vadd.f32 %v1130, %v1164
      %v1195 = vadd.f32 %v1131, %v1165
      %v1196 = vadd.f32 %v1132, %v1166
      %v1197 = vadd.f32 %v1133, %v1167
      %v1198 = vadd.f32 %v1134, %v1168
      %v1199 = vadd.f32 %v1135, %v1169
      %v1200 = vadd.f32 %v1136, %v1170
      %v1201 = vadd.f32 %v1137, %v1171
      %v1202 = vadd.f32 %v1138, %v1172
      %v1203 = vadd.f32 %v1139, %v1173
      %v1204 = vadd.f32 %v1140, %v1174
      %v1205 = vadd.f32 %v1141, %v1175
      %v1206 = vadd.f32 %v1142, %v1176
      %v1207 = vadd.f32 %v1143, %v1177
      %v1208 = vadd.f32 %v1144, %v1178
      %v1209 = vadd.f32 %v1145, %v1179
      %v1210 = vadd.f32 %v1146, %v1180
      %v1211 = vlaneseq
      %v1212 = vshrl.u32 %v1211, 7
      %v1213 = vsub.s32 0, %v1212
      %v1214 = vrot.slane %v1043, %v1213
      %v1215 = vmul.f32 %v899, %v1214
      %v1216 = vmul.f32 %v900, %v1214
      %v1217 = vmul.f32 %v901, %v1214
      %v1218 = vmul.f32 %v902, %v1214
      %v1219 = vmul.f32 %v903, %v1214
      %v1220 = vmul.f32 %v904, %v1214
      %v1221 = vmul.f32 %v905, %v1214
      %v1222 = vmul.f32 %v906, %v1214
      %v1223 = vmul.f32 %v907, %v1214
      %v1224 = vmul.f32 %v908, %v1214
      %v1225 = vmul.f32 %v909, %v1214
      %v1226 = vmul.f32 %v910, %v1214
      %v1227 = vmul.f32 %v911, %v1214
      %v1228 = vmul.f32 %v912, %v1214
      %v1229 = vmul.f32 %v913, %v1214
      %v1230 = vmul.f32 %v914, %v1214
      %v1231 = vmul.f32 %v915, %v1214
      %v1232 = vmul.f32 %v916, %v1214
      %v1233 = vmul.f32 %v917, %v1214
      %v1234 = vmul.f32 %v918, %v1214
      %v1235 = vmul.f32 %v919, %v1214
      %v1236 = vmul.f32 %v920, %v1214
      %v1237 = vmul.f32 %v921, %v1214
      %v1238 = vmul.f32 %v922, %v1214
      %v1239 = vmul.f32 %v923, %v1214
      %v1240 = vmul.f32 %v924, %v1214
      %v1241 = vmul.f32 %v925, %v1214
      %v1242 = vmul.f32 %v926, %v1214
      %v1243 = vmul.f32 %v927, %v1214
      %v1244 = vmul.f32 %v928, %v1214
      %v1245 = vmul.f32 %v929, %v1214
      %v1246 = vmul.f32 %v930, %v1214
      %v1247 = vlaneseq
      %v1248 = vshrl.u32 %v1247, 7
      %v1249 = vsub.s32 0, %v1248
      %v1250 = vrot.slane %v1044, %v1249
      %v1251 = vmul.f32 %v787, %v1250
      %v1252 = vmul.f32 %v788, %v1250
      %v1253 = vmul.f32 %v789, %v1250
      %v1254 = vmul.f32 %v790, %v1250
      %v1255 = vmul.f32 %v791, %v1250
      %v1256 = vmul.f32 %v792, %v1250
      %v1257 = vmul.f32 %v793, %v1250
      %v1258 = vmul.f32 %v794, %v1250
      %v1259 = vmul.f32 %v795, %v1250
      %v1260 = vmul.f32 %v796, %v1250
      %v1261 = vmul.f32 %v797, %v1250
      %v1262 = vmul.f32 %v798, %v1250
      %v1263 = vmul.f32 %v799, %v1250
      %v1264 = vmul.f32 %v800, %v1250
      %v1265 = vmul.f32 %v801, %v1250
      %v1266 = vmul.f32 %v802, %v1250
      %v1267 = vmul.f32 %v803, %v1250
      %v1268 = vmul.f32 %v804, %v1250
      %v1269 = vmul.f32 %v805, %v1250
      %v1270 = vmul.f32 %v806, %v1250
      %v1271 = vmul.f32 %v807, %v1250
      %v1272 = vmul.f32 %v808, %v1250
      %v1273 = vmul.f32 %v809, %v1250
      %v1274 = vmul.f32 %v810, %v1250
      %v1275 = vmul.f32 %v811, %v1250
      %v1276 = vmul.f32 %v812, %v1250
      %v1277 = vmul.f32 %v813, %v1250
      %v1278 = vmul.f32 %v814, %v1250
      %v1279 = vmul.f32 %v815, %v1250
      %v1280 = vmul.f32 %v816, %v1250
      %v1281 = vmul.f32 %v817, %v1250
      %v1282 = vmul.f32 %v818, %v1250
      %v1283 = vadd.f32 %v1215, %v1251
      %v1284 = vadd.f32 %v1216, %v1252
      %v1285 = vadd.f32 %v1217, %v1253
      %v1286 = vadd.f32 %v1218, %v1254
      %v1287 = vadd.f32 %v1219, %v1255
      %v1288 = vadd.f32 %v1220, %v1256
      %v1289 = vadd.f32 %v1221, %v1257
      %v1290 = vadd.f32 %v1222, %v1258
      %v1291 = vadd.f32 %v1223, %v1259
      %v1292 = vadd.f32 %v1224, %v1260
      %v1293 = vadd.f32 %v1225, %v1261
      %v1294 = vadd.f32 %v1226, %v1262
      %v1295 = vadd.f32 %v1227, %v1263
      %v1296 = vadd.f32 %v1228, %v1264
      %v1297 = vadd.f32 %v1229, %v1265
      %v1298 = vadd.f32 %v1230, %v1266
      %v1299 = vadd.f32 %v1231, %v1267
      %v1300 = vadd.f32 %v1232, %v1268
      %v1301 = vadd.f32 %v1233, %v1269
      %v1302 = vadd.f32 %v1234, %v1270
      %v1303 = vadd.f32 %v1235, %v1271
      %v1304 = vadd.f32 %v1236, %v1272
      %v1305 = vadd.f32 %v1237, %v1273
      %v1306 = vadd.f32 %v1238, %v1274
      %v1307 = vadd.f32 %v1239, %v1275
      %v1308 = vadd.f32 %v1240, %v1276
      %v1309 = vadd.f32 %v1241, %v1277
      %v1310 = vadd.f32 %v1242, %v1278
      %v1311 = vadd.f32 %v1243, %v1279
      %v1312 = vadd.f32 %v1244, %v1280
      %v1313 = vadd.f32 %v1245, %v1281
      %v1314 = vadd.f32 %v1246, %v1282
      %v1315 = vlaneseq
      %v1316 = vshrl.u32 %v1315, 7
      %v1317 = vsub.s32 0, %v1316
      %v1318 = vrot.slane %v1045, %v1317
      %v1319 = vmul.f32 %v1008, %v1318
      %v1320 = vmul.f32 %v1009, %v1318
      %v1321 = vmul.f32 %v1010, %v1318
      %v1322 = vmul.f32 %v1011, %v1318
      %v1323 = vmul.f32 %v1012, %v1318
      %v1324 = vmul.f32 %v1013, %v1318
      %v1325 = vmul.f32 %v1014, %v1318
      %v1326 = vmul.f32 %v1015, %v1318
      %v1327 = vmul.f32 %v1016, %v1318
      %v1328 = vmul.f32 %v1017, %v1318
      %v1329 = vmul.f32 %v1018, %v1318
      %v1330 = vmul.f32 %v1019, %v1318
      %v1331 = vmul.f32 %v1020, %v1318
      %v1332 = vmul.f32 %v1021, %v1318
      %v1333 = vmul.f32 %v1022, %v1318
      %v1334 = vmul.f32 %v1023, %v1318
      %v1335 = vmul.f32 %v1024, %v1318
      %v1336 = vmul.f32 %v1025, %v1318
      %v1337 = vmul.f32 %v1026, %v1318
      %v1338 = vmul.f32 %v1027, %v1318
      %v1339 = vmul.f32 %v1028, %v1318
      %v1340 = vmul.f32 %v1029, %v1318
      %v1341 = vmul.f32 %v1030, %v1318
      %v1342 = vmul.f32 %v1031, %v1318
      %v1343 = vmul.f32 %v1032, %v1318
      %v1344 = vmul.f32 %v1033, %v1318
      %v1345 = vmul.f32 %v1034, %v1318
      %v1346 = vmul.f32 %v1035, %v1318
      %v1347 = vmul.f32 %v1036, %v1318
      %v1348 = vmul.f32 %v1037, %v1318
      %v1349 = vmul.f32 %v1038, %v1318
      %v1350 = vmul.f32 %v1039, %v1318
      %v1351 = vadd.f32 %v1283, %v1319
      %v1352 = vadd.f32 %v1284, %v1320
      %v1353 = vadd.f32 %v1285, %v1321
      %v1354 = vadd.f32 %v1286, %v1322
      %v1355 = vadd.f32 %v1287, %v1323
      %v1356 = vadd.f32 %v1288, %v1324
      %v1357 = vadd.f32 %v1289, %v1325
      %v1358 = vadd.f32 %v1290, %v1326
      %v1359 = vadd.f32 %v1291, %v1327
      %v1360 = vadd.f32 %v1292, %v1328
      %v1361 = vadd.f32 %v1293, %v1329
      %v1362 = vadd.f32 %v1294, %v1330
      %v1363 = vadd.f32 %v1295, %v1331
      %v1364 = vadd.f32 %v1296, %v1332
      %v1365 = vadd.f32 %v1297, %v1333
      %v1366 = vadd.f32 %v1298, %v1334
      %v1367 = vadd.f32 %v1299, %v1335
      %v1368 = vadd.f32 %v1300, %v1336
      %v1369 = vadd.f32 %v1301, %v1337
      %v1370 = vadd.f32 %v1302, %v1338
      %v1371 = vadd.f32 %v1303, %v1339
      %v1372 = vadd.f32 %v1304, %v1340
      %v1373 = vadd.f32 %v1305, %v1341
      %v1374 = vadd.f32 %v1306, %v1342
      %v1375 = vadd.f32 %v1307, %v1343
      %v1376 = vadd.f32 %v1308, %v1344
      %v1377 = vadd.f32 %v1309, %v1345
      %v1378 = vadd.f32 %v1310, %v1346
      %v1379 = vadd.f32 %v1311, %v1347
      %v1380 = vadd.f32 %v1312, %v1348
      %v1381 = vadd.f32 %v1313, %v1349
      %v1382 = vadd.f32 %v1314, %v1350
      %v1383 = vadd.f32 %v1351, 0.0
      %v1384 = vadd.f32 %v1352, 0.0
      %v1385 = vadd.f32 %v1181, %v1353
      %v1386 = vadd.f32 %v1182, %v1354
      %v1387 = vadd.f32 %v1183, %v1355
      %v1388 = vadd.f32 %v1184, %v1356
      %v1389 = vadd.f32 %v1185, %v1357
      %v1390 = vadd.f32 %v1186, %v1358
      %v1391 = vadd.f32 %v1187, %v1359
      %v1392 = vadd.f32 %v1188, %v1360
      %v1393 = vadd.f32 %v1189, %v1361
      %v1394 = vadd.f32 %v1190, %v1362
      %v1395 = vadd.f32 %v1191, %v1363
      %v1396 = vadd.f32 %v1192, %v1364
      %v1397 = vadd.f32 %v1193, %v1365
      %v1398 = vadd.f32 %v1194, %v1366
      %v1399 = vadd.f32 %v1195, %v1367
      %v1400 = vadd.f32 %v1196, %v1368
      %v1401 = vadd.f32 %v1197, %v1369
      %v1402 = vadd.f32 %v1198, %v1370
      %v1403 = vadd.f32 %v1199, %v1371
      %v1404 = vadd.f32 %v1200, %v1372
      %v1405 = vadd.f32 %v1201, %v1373
      %v1406 = vadd.f32 %v1202, %v1374
      %v1407 = vadd.f32 %v1203, %v1375
      %v1408 = vadd.f32 %v1204, %v1376
      %v1409 = vadd.f32 %v1205, %v1377
      %v1410 = vadd.f32 %v1206, %v1378
      %v1411 = vadd.f32 %v1207, %v1379
      %v1412 = vadd.f32 %v1208, %v1380
      %v1413 = vadd.f32 %v1209, %v1381
      %v1414 = vadd.f32 %v1210, %v1382
      %v1415 = vlaneseq
      %v1416 = vshrl.u32 %v1415, 7
      %v1417 = vsub.s32 0, %v1416
      %v1418 = vrot.slane %v1046, %v1417
      %v1419 = vmul.f32 %v901, %v1418
      %v1420 = vmul.f32 %v902, %v1418
      %v1421 = vmul.f32 %v903, %v1418
      %v1422 = vmul.f32 %v904, %v1418
      %v1423 = vmul.f32 %v905, %v1418
      %v1424 = vmul.f32 %v906, %v1418
      %v1425 = vmul.f32 %v907, %v1418
      %v1426 = vmul.f32 %v908, %v1418
      %v1427 = vmul.f32 %v909, %v1418
      %v1428 = vmul.f32 %v910, %v1418
      %v1429 = vmul.f32 %v911, %v1418
      %v1430 = vmul.f32 %v912, %v1418
      %v1431 = vmul.f32 %v913, %v1418
      %v1432 = vmul.f32 %v914, %v1418
      %v1433 = vmul.f32 %v915, %v1418
      %v1434 = vmul.f32 %v916, %v1418
      %v1435 = vmul.f32 %v917, %v1418
      %v1436 = vmul.f32 %v918, %v1418
      %v1437 = vmul.f32 %v919, %v1418
      %v1438 = vmul.f32 %v920, %v1418
      %v1439 = vmul.f32 %v921, %v1418
      %v1440 = vmul.f32 %v922, %v1418
      %v1441 = vmul.f32 %v923, %v1418
      %v1442 = vmul.f32 %v924, %v1418
      %v1443 = vmul.f32 %v925, %v1418
      %v1444 = vmul.f32 %v926, %v1418
      %v1445 = vmul.f32 %v927, %v1418
      %v1446 = vmul.f32 %v928, %v1418
      %v1447 = vmul.f32 %v929, %v1418
      %v1448 = vmul.f32 %v930, %v1418
      %v1449 = vlaneseq
      %v1450 = vshrl.u32 %v1449, 7
      %v1451 = vsub.s32 0, %v1450
      %v1452 = vrot.slane %v1047, %v1451
      %v1453 = vmul.f32 %v789, %v1452
      %v1454 = vmul.f32 %v790, %v1452
      %v1455 = vmul.f32 %v791, %v1452
      %v1456 = vmul.f32 %v792, %v1452
      %v1457 = vmul.f32 %v793, %v1452
      %v1458 = vmul.f32 %v794, %v1452
      %v1459 = vmul.f32 %v795, %v1452
      %v1460 = vmul.f32 %v796, %v1452
      %v1461 = vmul.f32 %v797, %v1452
      %v1462 = vmul.f32 %v798, %v1452
      %v1463 = vmul.f32 %v799, %v1452
      %v1464 = vmul.f32 %v800, %v1452
      %v1465 = vmul.f32 %v801, %v1452
      %v1466 = vmul.f32 %v802, %v1452
      %v1467 = vmul.f32 %v803, %v1452
      %v1468 = vmul.f32 %v804, %v1452
      %v1469 = vmul.f32 %v805, %v1452
      %v1470 = vmul.f32 %v806, %v1452
      %v1471 = vmul.f32 %v807, %v1452
      %v1472 = vmul.f32 %v808, %v1452
      %v1473 = vmul.f32 %v809, %v1452
      %v1474 = vmul.f32 %v810, %v1452
      %v1475 = vmul.f32 %v811, %v1452
      %v1476 = vmul.f32 %v812, %v1452
      %v1477 = vmul.f32 %v813, %v1452
      %v1478 = vmul.f32 %v814, %v1452
      %v1479 = vmul.f32 %v815, %v1452
      %v1480 = vmul.f32 %v816, %v1452
      %v1481 = vmul.f32 %v817, %v1452
      %v1482 = vmul.f32 %v818, %v1452
      %v1483 = vadd.f32 %v1419, %v1453
      %v1484 = vadd.f32 %v1420, %v1454
      %v1485 = vadd.f32 %v1421, %v1455
      %v1486 = vadd.f32 %v1422, %v1456
      %v1487 = vadd.f32 %v1423, %v1457
      %v1488 = vadd.f32 %v1424, %v1458
      %v1489 = vadd.f32 %v1425, %v1459
      %v1490 = vadd.f32 %v1426, %v1460
      %v1491 = vadd.f32 %v1427, %v1461
      %v1492 = vadd.f32 %v1428, %v1462
      %v1493 = vadd.f32 %v1429, %v1463
      %v1494 = vadd.f32 %v1430, %v1464
      %v1495 = vadd.f32 %v1431, %v1465
      %v1496 = vadd.f32 %v1432, %v1466
      %v1497 = vadd.f32 %v1433, %v1467
      %v1498 = vadd.f32 %v1434, %v1468
      %v1499 = vadd.f32 %v1435, %v1469
      %v1500 = vadd.f32 %v1436, %v1470
      %v1501 = vadd.f32 %v1437, %v1471
      %v1502 = vadd.f32 %v1438, %v1472
      %v1503 = vadd.f32 %v1439, %v1473
      %v1504 = vadd.f32 %v1440, %v1474
      %v1505 = vadd.f32 %v1441, %v1475
      %v1506 = vadd.f32 %v1442, %v1476
      %v1507 = vadd.f32 %v1443, %v1477
      %v1508 = vadd.f32 %v1444, %v1478
      %v1509 = vadd.f32 %v1445, %v1479
      %v1510 = vadd.f32 %v1446, %v1480
      %v1511 = vadd.f32 %v1447, %v1481
      %v1512 = vadd.f32 %v1448, %v1482
      %v1513 = vlaneseq
      %v1514 = vshrl.u32 %v1513, 7
      %v1515 = vsub.s32 0, %v1514
      %v1516 = vrot.slane %v1048, %v1515
      %v1517 = vmul.f32 %v1010, %v1516
      %v1518 = vmul.f32 %v1011, %v1516
      %v1519 = vmul.f32 %v1012, %v1516
      %v1520 = vmul.f32 %v1013, %v1516
      %v1521 = vmul.f32 %v1014, %v1516
      %v1522 = vmul.f32 %v1015, %v1516
      %v1523 = vmul.f32 %v1016, %v1516
      %v1524 = vmul.f32 %v1017, %v1516
      %v1525 = vmul.f32 %v1018, %v1516
      %v1526 = vmul.f32 %v1019, %v1516
      %v1527 = vmul.f32 %v1020, %v1516
      %v1528 = vmul.f32 %v1021, %v1516
      %v1529 = vmul.f32 %v1022, %v1516
      %v1530 = vmul.f32 %v1023, %v1516
      %v1531 = vmul.f32 %v1024, %v1516
      %v1532 = vmul.f32 %v1025, %v1516
      %v1533 = vmul.f32 %v1026, %v1516
      %v1534 = vmul.f32 %v1027, %v1516
      %v1535 = vmul.f32 %v1028, %v1516
      %v1536 = vmul.f32 %v1029, %v1516
      %v1537 = vmul.f32 %v1030, %v1516
      %v1538 = vmul.f32 %v1031, %v1516
      %v1539 = vmul.f32 %v1032, %v1516
      %v1540 = vmul.f32 %v1033, %v1516
      %v1541 = vmul.f32 %v1034, %v1516
      %v1542 = vmul.f32 %v1035, %v1516
      %v1543 = vmul.f32 %v1036, %v1516
      %v1544 = vmul.f32 %v1037, %v1516
      %v1545 = vmul.f32 %v1038, %v1516
      %v1546 = vmul.f32 %v1039, %v1516
      %v1547 = vadd.f32 %v1483, %v1517
      %v1548 = vadd.f32 %v1484, %v1518
      %v1549 = vadd.f32 %v1485, %v1519
      %v1550 = vadd.f32 %v1486, %v1520
      %v1551 = vadd.f32 %v1487, %v1521
      %v1552 = vadd.f32 %v1488, %v1522
      %v1553 = vadd.f32 %v1489, %v1523
      %v1554 = vadd.f32 %v1490, %v1524
      %v1555 = vadd.f32 %v1491, %v1525
      %v1556 = vadd.f32 %v1492, %v1526
      %v1557 = vadd.f32 %v1493, %v1527
      %v1558 = vadd.f32 %v1494, %v1528
      %v1559 = vadd.f32 %v1495, %v1529
      %v1560 = vadd.f32 %v1496, %v1530
      %v1561 = vadd.f32 %v1497, %v1531
      %v1562 = vadd.f32 %v1498, %v1532
      %v1563 = vadd.f32 %v1499, %v1533
      %v1564 = vadd.f32 %v1500, %v1534
      %v1565 = vadd.f32 %v1501, %v1535
      %v1566 = vadd.f32 %v1502, %v1536
      %v1567 = vadd.f32 %v1503, %v1537
      %v1568 = vadd.f32 %v1504, %v1538
      %v1569 = vadd.f32 %v1505, %v1539
      %v1570 = vadd.f32 %v1506, %v1540
      %v1571 = vadd.f32 %v1507, %v1541
      %v1572 = vadd.f32 %v1508, %v1542
      %v1573 = vadd.f32 %v1509, %v1543
      %v1574 = vadd.f32 %v1510, %v1544
      %v1575 = vadd.f32 %v1511, %v1545
      %v1576 = vadd.f32 %v1512, %v1546
      %v1577 = vadd.f32 %v1383, %v1547
      %v1578 = vadd.f32 %v1384, %v1548
      %v1579 = vadd.f32 %v1385, %v1549
      %v1580 = vadd.f32 %v1386, %v1550
      %v1581 = vadd.f32 %v1387, %v1551
      %v1582 = vadd.f32 %v1388, %v1552
      %v1583 = vadd.f32 %v1389, %v1553
      %v1584 = vadd.f32 %v1390, %v1554
      %v1585 = vadd.f32 %v1391, %v1555
      %v1586 = vadd.f32 %v1392, %v1556
      %v1587 = vadd.f32 %v1393, %v1557
      %v1588 = vadd.f32 %v1394, %v1558
      %v1589 = vadd.f32 %v1395, %v1559
      %v1590 = vadd.f32 %v1396, %v1560
      %v1591 = vadd.f32 %v1397, %v1561
      %v1592 = vadd.f32 %v1398, %v1562
      %v1593 = vadd.f32 %v1399, %v1563
      %v1594 = vadd.f32 %v1400, %v1564
      %v1595 = vadd.f32 %v1401, %v1565
      %v1596 = vadd.f32 %v1402, %v1566
      %v1597 = vadd.f32 %v1403, %v1567
      %v1598 = vadd.f32 %v1404, %v1568
      %v1599 = vadd.f32 %v1405, %v1569
      %v1600 = vadd.f32 %v1406, %v1570
      %v1601 = vadd.f32 %v1407, %v1571
      %v1602 = vadd.f32 %v1408, %v1572
      %v1603 = vadd.f32 %v1409, %v1573
      %v1604 = vadd.f32 %v1410, %v1574
      %v1605 = vadd.f32 %v1411, %v1575
      %v1606 = vadd.f32 %v1412, %v1576
      %v1607 = vadd.f32 %v1413, 0.0
      %v1608 = vadd.f32 %v1414, 0.0
      %v1609 = vld [vmem:[%s4] sm:$0x1]
      %v1611 = vlaneseq
      %v1612 = vshrl.u32 %v1611, 7
      %v1613 = vsub.s32 0, %v1612
      %v1614 = vrot.slane %v1609, %v1613
      %v1616 = vadd.f32 %v1577, %v1614
      %v1617 = vadd.f32 %v1578, %v1614
      %v1618 = vadd.f32 %v1579, %v1614
      %v1619 = vadd.f32 %v1580, %v1614
      %v1620 = vadd.f32 %v1581, %v1614
      %v1621 = vadd.f32 %v1582, %v1614
      %v1622 = vadd.f32 %v1583, %v1614
      %v1623 = vadd.f32 %v1584, %v1614
      %v1624 = vadd.f32 %v1585, %v1614
      %v1625 = vadd.f32 %v1586, %v1614
      %v1626 = vadd.f32 %v1587, %v1614
      %v1627 = vadd.f32 %v1588, %v1614
      %v1628 = vadd.f32 %v1589, %v1614
      %v1629 = vadd.f32 %v1590, %v1614
      %v1630 = vadd.f32 %v1591, %v1614
      %v1631 = vadd.f32 %v1592, %v1614
      %v1632 = vadd.f32 %v1593, %v1614
      %v1633 = vadd.f32 %v1594, %v1614
      %v1634 = vadd.f32 %v1595, %v1614
      %v1635 = vadd.f32 %v1596, %v1614
      %v1636 = vadd.f32 %v1597, %v1614
      %v1637 = vadd.f32 %v1598, %v1614
      %v1638 = vadd.f32 %v1599, %v1614
      %v1639 = vadd.f32 %v1600, %v1614
      %v1640 = vadd.f32 %v1601, %v1614
      %v1641 = vadd.f32 %v1602, %v1614
      %v1642 = vadd.f32 %v1603, %v1614
      %v1643 = vadd.f32 %v1604, %v1614
      %v1644 = vadd.f32 %v1605, %v1614
      %v1645 = vadd.f32 %v1606, %v1614
      %v1646 = vadd.f32 %v1607, %v1614
      %v1647 = vadd.f32 %v1608, %v1614
      %vm1648 = vcmask 130048
      %v1649 = vsel %vm1648, %v1616, 0.0
      %v1650 = vsel %vm1648, %v1617, 0.0
      %v1651 = vadd.f32 %v1649, %v1650
      %v1652 = vsel %vm1648, %v1618, 0.0
      %v1653 = vadd.f32 %v1651, %v1652
      %v1654 = vsel %vm1648, %v1619, 0.0
      %v1655 = vadd.f32 %v1653, %v1654
      %v1656 = vsel %vm1648, %v1620, 0.0
      %v1657 = vadd.f32 %v1655, %v1656
      %v1658 = vsel %vm1648, %v1621, 0.0
      %v1659 = vadd.f32 %v1657, %v1658
      %v1660 = vsel %vm1648, %v1622, 0.0
      %v1661 = vadd.f32 %v1659, %v1660
      %v1662 = vsel %vm1648, %v1623, 0.0
      %v1663 = vadd.f32 %v1661, %v1662
      %v1664 = vsel %vm1648, %v1624, 0.0
      %v1665 = vadd.f32 %v1663, %v1664
      %v1666 = vsel %vm1648, %v1625, 0.0
      %v1667 = vadd.f32 %v1665, %v1666
      %v1668 = vsel %vm1648, %v1626, 0.0
      %v1669 = vadd.f32 %v1667, %v1668
      %v1670 = vsel %vm1648, %v1627, 0.0
      %v1671 = vadd.f32 %v1669, %v1670
      %v1672 = vsel %vm1648, %v1628, 0.0
      %v1673 = vadd.f32 %v1671, %v1672
      %v1674 = vsel %vm1648, %v1629, 0.0
      %v1675 = vadd.f32 %v1673, %v1674
      %v1676 = vsel %vm1648, %v1630, 0.0
      %v1677 = vadd.f32 %v1675, %v1676
      %v1678 = vsel %vm1648, %v1631, 0.0
      %v1679 = vadd.f32 %v1677, %v1678
      %v1680 = vsel %vm1648, %v1632, 0.0
      %v1681 = vadd.f32 %v1679, %v1680
      %v1682 = vsel %vm1648, %v1633, 0.0
      %v1683 = vadd.f32 %v1681, %v1682
      %v1684 = vsel %vm1648, %v1634, 0.0
      %v1685 = vadd.f32 %v1683, %v1684
      %v1686 = vsel %vm1648, %v1635, 0.0
      %v1687 = vadd.f32 %v1685, %v1686
      %v1688 = vsel %vm1648, %v1636, 0.0
      %v1689 = vadd.f32 %v1687, %v1688
      %v1690 = vsel %vm1648, %v1637, 0.0
      %v1691 = vadd.f32 %v1689, %v1690
      %v1692 = vsel %vm1648, %v1638, 0.0
      %v1693 = vadd.f32 %v1691, %v1692
      %v1694 = vsel %vm1648, %v1639, 0.0
      %v1695 = vadd.f32 %v1693, %v1694
      %v1696 = vsel %vm1648, %v1640, 0.0
      %v1697 = vadd.f32 %v1695, %v1696
      %v1698 = vsel %vm1648, %v1641, 0.0
      %v1699 = vadd.f32 %v1697, %v1698
      %v1700 = vsel %vm1648, %v1642, 0.0
      %v1701 = vadd.f32 %v1699, %v1700
      %v1702 = vsel %vm1648, %v1643, 0.0
      %v1703 = vadd.f32 %v1701, %v1702
      %v1704 = vsel %vm1648, %v1644, 0.0
      %v1705 = vadd.f32 %v1703, %v1704
      %v1706 = vsel %vm1648, %v1645, 0.0
      %v1707 = vadd.f32 %v1705, %v1706
      %v1708 = vsel %vm1648, %v1646, 0.0
      %v1709 = vadd.f32 %v1707, %v1708
      %v1710 = vsel %vm1648, %v1647, 0.0
      %v1711 = vadd.f32 %v1709, %v1710
      %v1712 = vrot.slane %v1711, 4
      %v1713 = vadd.f32 %v1711, %v1712
      %v1714 = vrot.slane %v1713, 2
      %v1715 = vadd.f32 %v1713, %v1714
      %v1716 = vrot.slane %v1715, 1
      %v1717 = vadd.f32 %v1715, %v1716
      %v1718 = vrcp.pop 256.0
      %v1719 = vmul.f32 %v1717, %v1718
      %v1720 = vld [vmem:[%s5] sm:$0xff]
      %v1721 = vld [vmem:[%s5 + $0x8] sm:$0xff]
      %v1722 = vld [vmem:[%s6] sm:$0x1]
      %v1724 = vsel %vm1648, %v1719, 0
      %1726 = vmatprep.subr.mxu0 0.0
      %1727 = vmatpush1.msra.mxu0 %v1720
      %1728 = vmatprep.subr.mxu0 0.0
      %1729 = vmatpush1.msra.mxu0 %v1721
      %1730 = vmatprep.subr.mxu0 0.0
      %1731 = vmatpush1.msra.mxu0 0.0
      %1732 = vmatprep.subr.mxu0 0.0
      %1733 = vmatpush1.msra.mxu0 0.0
      %1734 = vmatprep.subr.mxu0 0.0
      %1735 = vmatpush1.msra.mxu0 0.0
      %1736 = vmatprep.subr.mxu0 0.0
      %1737 = vmatpush1.msra.mxu0 0.0
      %1738 = vmatprep.subr.mxu0 0.0
      %1739 = vmatpush1.msra.mxu0 0.0
      %1740 = vmatprep.subr.mxu0 0.0
      %1741 = vmatpush1.msra.mxu0 0.0
      %1742 = vmatprep.subr.mxu0 0.0
      %1743 = vmatpush1.msra.mxu0 0.0
      %1744 = vmatprep.subr.mxu0 0.0
      %1745 = vmatpush1.msra.mxu0 0.0
      %1746 = vmatprep.subr.mxu0 0.0
      %1747 = vmatpush1.msra.mxu0 0.0
      %1748 = vmatprep.subr.mxu0 0.0
      %1749 = vmatpush1.msra.mxu0 0.0
      %1750 = vmatprep.subr.mxu0 0.0
      %1751 = vmatpush1.msra.mxu0 0.0
      %1752 = vmatprep.subr.mxu0 0.0
      %1753 = vmatpush1.msra.mxu0 0.0
      %1754 = vmatprep.subr.mxu0 0.0
      %1755 = vmatpush1.msra.mxu0 0.0
      %1756 = vmatprep.subr.mxu0 0.0
      %1757 = vmatpush1.msra.mxu0 0.0
      %1758 = vmatprep.subr.mxu0 0.0
      %1759 = vmatpush1.msra.mxu0 0.0
      %1760 = vmatprep.subr.mxu0 0.0
      %1761 = vmatpush1.msra.mxu0 0.0
      %1762 = vmatprep.subr.mxu0 0.0
      %1763 = vmatpush1.msra.mxu0 0.0
      %1764 = vmatprep.subr.mxu0 0.0
      %1765 = vmatpush1.msra.mxu0 0.0
      %1766 = vmatprep.subr.mxu0 0.0
      %1767 = vmatpush1.msra.mxu0 0.0
      %1768 = vmatprep.subr.mxu0 0.0
      %1769 = vmatpush1.msra.mxu0 0.0
      %1770 = vmatprep.subr.mxu0 0.0
      %1771 = vmatpush1.msra.mxu0 0.0
      %1772 = vmatprep.subr.mxu0 0.0
      %1773 = vmatpush1.msra.mxu0 0.0
      %1774 = vmatprep.subr.mxu0 0.0
      %1775 = vmatpush1.msra.mxu0 0.0
      %1776 = vmatprep.subr.mxu0 0.0
      %1777 = vmatpush1.msra.mxu0 0.0
      %1778 = vmatprep.subr.mxu0 0.0
      %1779 = vmatpush1.msra.mxu0 0.0
      %1780 = vmatprep.subr.mxu0 0.0
      %1781 = vmatpush1.msra.mxu0 0.0
      %1782 = vmatprep.subr.mxu0 0.0
      %1783 = vmatpush1.msra.mxu0 0.0
      %1784 = vmatprep.subr.mxu0 0.0
      %1785 = vmatpush1.msra.mxu0 0.0
      %1786 = vmatprep.subr.mxu0 0.0
      %1787 = vmatpush1.msra.mxu0 0.0
      %1788 = vmatprep.subr.mxu0 0.0
      %1789 = vmatpush1.msra.mxu0 0.0
      %1790 = vmatprep.mubr.f32.mxu0 0.0
      %1791 = vmatmul.mubr.f32.gmra.mrb[0].mxu0 %v1724
      %v1792 = vpop.f32.mrb[0].mxu0
      %v1793 = vadd.f32 %v1722, %v1792
      %v1794 = vpop.f32.mrb[0].mxu0
      %1795 = vdwg.mxu0
      %v1796 = vmax.f32 %v1793, 0.0
      %v1797 = vld [vmem:[%s7] sm:$0xff]
      %v1798 = vld [vmem:[%s8] sm:$0x1]
      %v1800 = vsel %vm445, %v1796, 0
      %1802 = vmatprep.subr.mxu0 0.0
      %1803 = vmatpush1.msra.mxu0 %v1797
      %1804 = vmatprep.subr.mxu0 0.0
      %1805 = vmatpush1.msra.mxu0 0.0
      %1806 = vmatprep.subr.mxu0 0.0
      %1807 = vmatpush1.msra.mxu0 0.0
      %1808 = vmatprep.subr.mxu0 0.0
      %1809 = vmatpush1.msra.mxu0 0.0
      %1810 = vmatprep.subr.mxu0 0.0
      %1811 = vmatpush1.msra.mxu0 0.0
      %1812 = vmatprep.subr.mxu0 0.0
      %1813 = vmatpush1.msra.mxu0 0.0
      %1814 = vmatprep.subr.mxu0 0.0
      %1815 = vmatpush1.msra.mxu0 0.0
      %1816 = vmatprep.subr.mxu0 0.0
      %1817 = vmatpush1.msra.mxu0 0.0
      %1818 = vmatprep.subr.mxu0 0.0
      %1819 = vmatpush1.msra.mxu0 0.0
      %1820 = vmatprep.subr.mxu0 0.0
      %1821 = vmatpush1.msra.mxu0 0.0
      %1822 = vmatprep.subr.mxu0 0.0
      %1823 = vmatpush1.msra.mxu0 0.0
      %1824 = vmatprep.subr.mxu0 0.0
      %1825 = vmatpush1.msra.mxu0 0.0
      %1826 = vmatprep.subr.mxu0 0.0
      %1827 = vmatpush1.msra.mxu0 0.0
      %1828 = vmatprep.subr.mxu0 0.0
      %1829 = vmatpush1.msra.mxu0 0.0
      %1830 = vmatprep.subr.mxu0 0.0
      %1831 = vmatpush1.msra.mxu0 0.0
      %1832 = vmatprep.subr.mxu0 0.0
      %1833 = vmatpush1.msra.mxu0 0.0
      %1834 = vmatprep.subr.mxu0 0.0
      %1835 = vmatpush1.msra.mxu0 0.0
      %1836 = vmatprep.subr.mxu0 0.0
      %1837 = vmatpush1.msra.mxu0 0.0
      %1838 = vmatprep.subr.mxu0 0.0
      %1839 = vmatpush1.msra.mxu0 0.0
      %1840 = vmatprep.subr.mxu0 0.0
      %1841 = vmatpush1.msra.mxu0 0.0
      %1842 = vmatprep.subr.mxu0 0.0
      %1843 = vmatpush1.msra.mxu0 0.0
      %1844 = vmatprep.subr.mxu0 0.0
      %1845 = vmatpush1.msra.mxu0 0.0
      %1846 = vmatprep.subr.mxu0 0.0
      %1847 = vmatpush1.msra.mxu0 0.0
      %1848 = vmatprep.subr.mxu0 0.0
      %1849 = vmatpush1.msra.mxu0 0.0
      %1850 = vmatprep.subr.mxu0 0.0
      %1851 = vmatpush1.msra.mxu0 0.0
      %1852 = vmatprep.subr.mxu0 0.0
      %1853 = vmatpush1.msra.mxu0 0.0
      %1854 = vmatprep.subr.mxu0 0.0
      %1855 = vmatpush1.msra.mxu0 0.0
      %1856 = vmatprep.subr.mxu0 0.0
      %1857 = vmatpush1.msra.mxu0 0.0
      %1858 = vmatprep.subr.mxu0 0.0
      %1859 = vmatpush1.msra.mxu0 0.0
      %1860 = vmatprep.subr.mxu0 0.0
      %1861 = vmatpush1.msra.mxu0 0.0
      %1862 = vmatprep.subr.mxu0 0.0
      %1863 = vmatpush1.msra.mxu0 0.0
      %1864 = vmatprep.subr.mxu0 0.0
      %1865 = vmatpush1.msra.mxu0 0.0
      %1866 = vmatprep.mubr.f32.mxu0 0.0
      %1867 = vmatmul.mubr.f32.gmra.mrb[0].mxu0 %v1800
      %v1868 = vpop.f32.mrb[0].mxu0
      %v1869 = vadd.f32 %v1798, %v1868
      %v1870 = vpop.f32.mrb[0].mxu0
      %1871 = vdwg.mxu0
      %v1872 = vadd.f32 %v1869, 3.0
      %v1873 = vmax.f32 %v1872, 0.0
      %v1874 = vmin.f32 %v1873, 6.0
      %v1875 = vmul.f32 %v1874, 0.16666667
      %v1876 = vlaneseq
      %v1877 = vshrl.u32 %v1876, 7
      %v1878 = vsub.s32 0, %v1877
      %v1879 = vrot.slane %v1875, %v1878
      %v1880 = vmul.f32 %v1616, %v1879
      %v1881 = vmul.f32 %v1617, %v1879
      %v1882 = vmul.f32 %v1618, %v1879
      %v1883 = vmul.f32 %v1619, %v1879
      %v1884 = vmul.f32 %v1620, %v1879
      %v1885 = vmul.f32 %v1621, %v1879
      %v1886 = vmul.f32 %v1622, %v1879
      %v1887 = vmul.f32 %v1623, %v1879
      %v1888 = vmul.f32 %v1624, %v1879
      %v1889 = vmul.f32 %v1625, %v1879
      %v1890 = vmul.f32 %v1626, %v1879
      %v1891 = vmul.f32 %v1627, %v1879
      %v1892 = vmul.f32 %v1628, %v1879
      %v1893 = vmul.f32 %v1629, %v1879
      %v1894 = vmul.f32 %v1630, %v1879
      %v1895 = vmul.f32 %v1631, %v1879
      %v1896 = vmul.f32 %v1632, %v1879
      %v1897 = vmul.f32 %v1633, %v1879
      %v1898 = vmul.f32 %v1634, %v1879
      %v1899 = vmul.f32 %v1635, %v1879
      %v1900 = vmul.f32 %v1636, %v1879
      %v1901 = vmul.f32 %v1637, %v1879
      %v1902 = vmul.f32 %v1638, %v1879
      %v1903 = vmul.f32 %v1639, %v1879
      %v1904 = vmul.f32 %v1640, %v1879
      %v1905 = vmul.f32 %v1641, %v1879
      %v1906 = vmul.f32 %v1642, %v1879
      %v1907 = vmul.f32 %v1643, %v1879
      %v1908 = vmul.f32 %v1644, %v1879
      %v1909 = vmul.f32 %v1645, %v1879
      %v1910 = vmul.f32 %v1646, %v1879
      %v1911 = vmul.f32 %v1647, %v1879
      %v1912 = vadd.f32 %v1880, 3.0
      %v1913 = vadd.f32 %v1881, 3.0
      %v1914 = vadd.f32 %v1882, 3.0
      %v1915 = vadd.f32 %v1883, 3.0
      %v1916 = vadd.f32 %v1884, 3.0
      %v1917 = vadd.f32 %v1885, 3.0
      %v1918 = vadd.f32 %v1886, 3.0
      %v1919 = vadd.f32 %v1887, 3.0
      %v1920 = vadd.f32 %v1888, 3.0
      %v1921 = vadd.f32 %v1889, 3.0
      %v1922 = vadd.f32 %v1890, 3.0
      %v1923 = vadd.f32 %v1891, 3.0
      %v1924 = vadd.f32 %v1892, 3.0
      %v1925 = vadd.f32 %v1893, 3.0
      %v1926 = vadd.f32 %v1894, 3.0
      %v1927 = vadd.f32 %v1895, 3.0
      %v1928 = vadd.f32 %v1896, 3.0
      %v1929 = vadd.f32 %v1897, 3.0
      %v1930 = vadd.f32 %v1898, 3.0
      %v1931 = vadd.f32 %v1899, 3.0
      %v1932 = vadd.f32 %v1900, 3.0
      %v1933 = vadd.f32 %v1901, 3.0
      %v1934 = vadd.f32 %v1902, 3.0
      %v1935 = vadd.f32 %v1903, 3.0
      %v1936 = vadd.f32 %v1904, 3.0
      %v1937 = vadd.f32 %v1905, 3.0
      %v1938 = vadd.f32 %v1906, 3.0
      %v1939 = vadd.f32 %v1907, 3.0
      %v1940 = vadd.f32 %v1908, 3.0
      %v1941 = vadd.f32 %v1909, 3.0
      %v1942 = vadd.f32 %v1910, 3.0
      %v1943 = vadd.f32 %v1911, 3.0
      %v1944 = vmax.f32 %v1912, 0.0
      %v1945 = vmax.f32 %v1913, 0.0
      %v1946 = vmax.f32 %v1914, 0.0
      %v1947 = vmax.f32 %v1915, 0.0
      %v1948 = vmax.f32 %v1916, 0.0
      %v1949 = vmax.f32 %v1917, 0.0
      %v1950 = vmax.f32 %v1918, 0.0
      %v1951 = vmax.f32 %v1919, 0.0
      %v1952 = vmax.f32 %v1920, 0.0
      %v1953 = vmax.f32 %v1921, 0.0
      %v1954 = vmax.f32 %v1922, 0.0
      %v1955 = vmax.f32 %v1923, 0.0
      %v1956 = vmax.f32 %v1924, 0.0
      %v1957 = vmax.f32 %v1925, 0.0
      %v1958 = vmax.f32 %v1926, 0.0
      %v1959 = vmax.f32 %v1927, 0.0
      %v1960 = vmax.f32 %v1928, 0.0
      %v1961 = vmax.f32 %v1929, 0.0
      %v1962 = vmax.f32 %v1930, 0.0
      %v1963 = vmax.f32 %v1931, 0.0
      %v1964 = vmax.f32 %v1932, 0.0
      %v1965 = vmax.f32 %v1933, 0.0
      %v1966 = vmax.f32 %v1934, 0.0
      %v1967 = vmax.f32 %v1935, 0.0
      %v1968 = vmax.f32 %v1936, 0.0
      %v1969 = vmax.f32 %v1937, 0.0
      %v1970 = vmax.f32 %v1938, 0.0
      %v1971 = vmax.f32 %v1939, 0.0
      %v1972 = vmax.f32 %v1940, 0.0
      %v1973 = vmax.f32 %v1941, 0.0
      %v1974 = vmax.f32 %v1942, 0.0
      %v1975 = vmax.f32 %v1943, 0.0
      %v1976 = vmin.f32 %v1944, 6.0
      %v1977 = vmin.f32 %v1945, 6.0
      %v1978 = vmin.f32 %v1946, 6.0
      %v1979 = vmin.f32 %v1947, 6.0
      %v1980 = vmin.f32 %v1948, 6.0
      %v1981 = vmin.f32 %v1949, 6.0
      %v1982 = vmin.f32 %v1950, 6.0
      %v1983 = vmin.f32 %v1951, 6.0
      %v1984 = vmin.f32 %v1952, 6.0
      %v1985 = vmin.f32 %v1953, 6.0
      %v1986 = vmin.f32 %v1954, 6.0
      %v1987 = vmin.f32 %v1955, 6.0
      %v1988 = vmin.f32 %v1956, 6.0
      %v1989 = vmin.f32 %v1957, 6.0
      %v1990 = vmin.f32 %v1958, 6.0
      %v1991 = vmin.f32 %v1959, 6.0
      %v1992 = vmin.f32 %v1960, 6.0
      %v1993 = vmin.f32 %v1961, 6.0
      %v1994 = vmin.f32 %v1962, 6.0
      %v1995 = vmin.f32 %v1963, 6.0
      %v1996 = vmin.f32 %v1964, 6.0
      %v1997 = vmin.f32 %v1965, 6.0
      %v1998 = vmin.f32 %v1966, 6.0
      %v1999 = vmin.f32 %v1967, 6.0
      %v2000 = vmin.f32 %v1968, 6.0
      %v2001 = vmin.f32 %v1969, 6.0
      %v2002 = vmin.f32 %v1970, 6.0
      %v2003 = vmin.f32 %v1971, 6.0
      %v2004 = vmin.f32 %v1972, 6.0
      %v2005 = vmin.f32 %v1973, 6.0
      %v2006 = vmin.f32 %v1974, 6.0
      %v2007 = vmin.f32 %v1975, 6.0
      %v2008 = vmul.f32 %v1880, %v1976
      %v2009 = vmul.f32 %v1881, %v1977
      %v2010 = vmul.f32 %v1882, %v1978
      %v2011 = vmul.f32 %v1883, %v1979
      %v2012 = vmul.f32 %v1884, %v1980
      %v2013 = vmul.f32 %v1885, %v1981
      %v2014 = vmul.f32 %v1886, %v1982
      %v2015 = vmul.f32 %v1887, %v1983
      %v2016 = vmul.f32 %v1888, %v1984
      %v2017 = vmul.f32 %v1889, %v1985
      %v2018 = vmul.f32 %v1890, %v1986
      %v2019 = vmul.f32 %v1891, %v1987
      %v2020 = vmul.f32 %v1892, %v1988
      %v2021 = vmul.f32 %v1893, %v1989
      %v2022 = vmul.f32 %v1894, %v1990
      %v2023 = vmul.f32 %v1895, %v1991
      %v2024 = vmul.f32 %v1896, %v1992
      %v2025 = vmul.f32 %v1897, %v1993
      %v2026 = vmul.f32 %v1898, %v1994
      %v2027 = vmul.f32 %v1899, %v1995
      %v2028 = vmul.f32 %v1900, %v1996
      %v2029 = vmul.f32 %v1901, %v1997
      %v2030 = vmul.f32 %v1902, %v1998
      %v2031 = vmul.f32 %v1903, %v1999
      %v2032 = vmul.f32 %v1904, %v2000
      %v2033 = vmul.f32 %v1905, %v2001
      %v2034 = vmul.f32 %v1906, %v2002
      %v2035 = vmul.f32 %v1907, %v2003
      %v2036 = vmul.f32 %v1908, %v2004
      %v2037 = vmul.f32 %v1909, %v2005
      %v2038 = vmul.f32 %v1910, %v2006
      %v2039 = vmul.f32 %v1911, %v2007
      %v2040 = vmul.f32 %v2008, 0.16666667
      %v2041 = vmul.f32 %v2009, 0.16666667
      %v2042 = vmul.f32 %v2010, 0.16666667
      %v2043 = vmul.f32 %v2011, 0.16666667
      %v2044 = vmul.f32 %v2012, 0.16666667
      %v2045 = vmul.f32 %v2013, 0.16666667
      %v2046 = vmul.f32 %v2014, 0.16666667
      %v2047 = vmul.f32 %v2015, 0.16666667
      %v2048 = vmul.f32 %v2016, 0.16666667
      %v2049 = vmul.f32 %v2017, 0.16666667
      %v2050 = vmul.f32 %v2018, 0.16666667
      %v2051 = vmul.f32 %v2019, 0.16666667
      %v2052 = vmul.f32 %v2020, 0.16666667
      %v2053 = vmul.f32 %v2021, 0.16666667
      %v2054 = vmul.f32 %v2022, 0.16666667
      %v2055 = vmul.f32 %v2023, 0.16666667
      %v2056 = vmul.f32 %v2024, 0.16666667
      %v2057 = vmul.f32 %v2025, 0.16666667
      %v2058 = vmul.f32 %v2026, 0.16666667
      %v2059 = vmul.f32 %v2027, 0.16666667
      %v2060 = vmul.f32 %v2028, 0.16666667
      %v2061 = vmul.f32 %v2029, 0.16666667
      %v2062 = vmul.f32 %v2030, 0.16666667
      %v2063 = vmul.f32 %v2031, 0.16666667
      %v2064 = vmul.f32 %v2032, 0.16666667
      %v2065 = vmul.f32 %v2033, 0.16666667
      %v2066 = vmul.f32 %v2034, 0.16666667
      %v2067 = vmul.f32 %v2035, 0.16666667
      %v2068 = vmul.f32 %v2036, 0.16666667
      %v2069 = vmul.f32 %v2037, 0.16666667
      %v2070 = vmul.f32 %v2038, 0.16666667
      %v2071 = vmul.f32 %v2039, 0.16666667
      %v2072 = vpack.c.bf16 %v2041, %v2040
      %v2073 = vpack.c.bf16 %v2043, %v2042
      %v2074 = vpack.c.bf16 %v2045, %v2044
      %v2075 = vpack.c.bf16 %v2047, %v2046
      %v2076 = vpack.c.bf16 %v2049, %v2048
      %v2077 = vpack.c.bf16 %v2051, %v2050
      %v2078 = vpack.c.bf16 %v2053, %v2052
      %v2079 = vpack.c.bf16 %v2055, %v2054
      %v2080 = vpack.c.bf16 %v2057, %v2056
      %v2081 = vpack.c.bf16 %v2059, %v2058
      %v2082 = vpack.c.bf16 %v2061, %v2060
      %v2083 = vpack.c.bf16 %v2063, %v2062
      %v2084 = vpack.c.bf16 %v2065, %v2064
      %v2085 = vpack.c.bf16 %v2067, %v2066
      %v2086 = vpack.c.bf16 %v2069, %v2068
      %v2087 = vpack.c.bf16 %v2071, %v2070
      %v2088 = vld [vmem:[%s9] sm:$0xff]
      %v2089 = vld [vmem:[%s9 + $0x8] sm:$0xff]
      %v2090 = vpack.c.bf16 %v2089, %v2088
      %v2091 = vld [vmem:[%s10] sm:$0x1]
      %v2093 = vlaneseq
      %v2094 = vshrl.u32 %v2093, 7
      %v2095 = vsub.s32 0, %v2094
      %v2096 = vrot.slane %v2091, %v2095
      %v2099 = vsel %vm1648, %v2072, 0
      %v2102 = vsel %vm1648, %v2073, 0
      %v2105 = vsel %vm1648, %v2074, 0
      %v2108 = vsel %vm1648, %v2075, 0
      %v2111 = vsel %vm1648, %v2076, 0
      %v2114 = vsel %vm1648, %v2077, 0
      %v2117 = vsel %vm1648, %v2078, 0
      %v2120 = vsel %vm1648, %v2079, 0
      %v2123 = vsel %vm1648, %v2080, 0
      %v2126 = vsel %vm1648, %v2081, 0
      %v2129 = vsel %vm1648, %v2082, 0
      %v2132 = vsel %vm1648, %v2083, 0
      %v2135 = vsel %vm1648, %v2084, 0
      %v2138 = vsel %vm1648, %v2085, 0
      %v2141 = vsel %vm1648, %v2086, 0
      %v2144 = vsel %vm1648, %v2087, 0
      %2146 = vmatprep.subr.bf16.mxu0 0
      %2147 = vmatpush1.bf16.msra.mxu0 %v2090
      %2148 = vmatprep.subr.bf16.mxu0 0
      %2149 = vmatpush1.bf16.msra.mxu0 0
      %2150 = vmatprep.subr.bf16.mxu0 0
      %2151 = vmatpush1.bf16.msra.mxu0 0
      %2152 = vmatprep.subr.bf16.mxu0 0
      %2153 = vmatpush1.bf16.msra.mxu0 0
      %2154 = vmatprep.subr.bf16.mxu0 0
      %2155 = vmatpush1.bf16.msra.mxu0 0
      %2156 = vmatprep.subr.bf16.mxu0 0
      %2157 = vmatpush1.bf16.msra.mxu0 0
      %2158 = vmatprep.subr.bf16.mxu0 0
      %2159 = vmatpush1.bf16.msra.mxu0 0
      %2160 = vmatprep.subr.bf16.mxu0 0
      %2161 = vmatpush1.bf16.msra.mxu0 0
      %2162 = vmatprep.subr.bf16.mxu0 0
      %2163 = vmatpush1.bf16.msra.mxu0 0
      %2164 = vmatprep.subr.bf16.mxu0 0
      %2165 = vmatpush1.bf16.msra.mxu0 0
      %2166 = vmatprep.subr.bf16.mxu0 0
      %2167 = vmatpush1.bf16.msra.mxu0 0
      %2168 = vmatprep.subr.bf16.mxu0 0
      %2169 = vmatpush1.bf16.msra.mxu0 0
      %2170 = vmatprep.subr.bf16.mxu0 0
      %2171 = vmatpush1.bf16.msra.mxu0 0
      %2172 = vmatprep.subr.bf16.mxu0 0
      %2173 = vmatpush1.bf16.msra.mxu0 0
      %2174 = vmatprep.subr.bf16.mxu0 0
      %2175 = vmatpush1.bf16.msra.mxu0 0
      %2176 = vmatprep.subr.bf16.mxu0 0
      %2177 = vmatpush1.bf16.msra.mxu0 0
      %2178 = vmatprep.mubr.bf16.mxu0 0
      %2179 = vmatmul.mubr.bf16.gmra.mrb[0].mxu0 %v2099
      %v2180 = vpop.f32.mrb[0].mxu0
      %v2181 = vadd.f32 %v2096, %v2180
      %v2182 = vpop.f32.mrb[0].mxu0
      %v2183 = vpop.f32.mrb[0].mxu0
      %v2184 = vadd.f32 %v2096, %v2183
      %v2185 = vpop.f32.mrb[0].mxu0
      %2186 = vmatprep.mubr.bf16.mxu0 0
      %2187 = vmatmul.mubr.bf16.gmra.mrb[0].mxu0 %v2102
      %v2188 = vpop.f32.mrb[0].mxu0
      %v2189 = vadd.f32 %v2096, %v2188
      %v2190 = vpop.f32.mrb[0].mxu0
      %v2191 = vpop.f32.mrb[0].mxu0
      %v2192 = vadd.f32 %v2096, %v2191
      %v2193 = vpop.f32.mrb[0].mxu0
      %2194 = vmatprep.mubr.bf16.mxu0 0
      %2195 = vmatmul.mubr.bf16.gmra.mrb[0].mxu0 %v2105
      %v2196 = vpop.f32.mrb[0].mxu0
      %v2197 = vadd.f32 %v2096, %v2196
      %v2198 = vpop.f32.mrb[0].mxu0
      %v2199 = vpop.f32.mrb[0].mxu0
      %v2200 = vadd.f32 %v2096, %v2199
      %v2201 = vpop.f32.mrb[0].mxu0
      %2202 = vmatprep.mubr.bf16.mxu0 0
      %2203 = vmatmul.mubr.bf16.gmra.mrb[0].mxu0 %v2108
      %v2204 = vpop.f32.mrb[0].mxu0
      %v2205 = vadd.f32 %v2096, %v2204
      %v2206 = vpop.f32.mrb[0].mxu0
      %v2207 = vpop.f32.mrb[0].mxu0
      %v2208 = vadd.f32 %v2096, %v2207
      %v2209 = vpop.f32.mrb[0].mxu0
      %2210 = vmatprep.mubr.bf16.mxu0 0
      %2211 = vmatmul.mubr.bf16.gmra.mrb[0].mxu0 %v2111
      %v2212 = vpop.f32.mrb[0].mxu0
      %v2213 = vadd.f32 %v2096, %v2212
      %v2214 = vpop.f32.mrb[0].mxu0
      %v2215 = vpop.f32.mrb[0].mxu0
      %v2216 = vadd.f32 %v2096, %v2215
      %v2217 = vpop.f32.mrb[0].mxu0
      %2218 = vmatprep.mubr.bf16.mxu0 0
      %2219 = vmatmul.mubr.bf16.gmra.mrb[0].mxu0 %v2114
      %v2220 = vpop.f32.mrb[0].mxu0
      %v2221 = vadd.f32 %v2096, %v2220
      %v2222 = vpop.f32.mrb[0].mxu0
      %v2223 = vpop.f32.mrb[0].mxu0
      %v2224 = vadd.f32 %v2096, %v2223
      %v2225 = vpop.f32.mrb[0].mxu0
      %2226 = vmatprep.mubr.bf16.mxu0 0
      %2227 = vmatmul.mubr.bf16.gmra.mrb[0].mxu0 %v2117
      %v2228 = vpop.f32.mrb[0].mxu0
      %v2229 = vadd.f32 %v2096, %v2228
      %v2230 = vpop.f32.mrb[0].mxu0
      %v2231 = vpop.f32.mrb[0].mxu0
      %v2232 = vadd.f32 %v2096, %v2231
      %v2233 = vpop.f32.mrb[0].mxu0
      %2234 = vmatprep.mubr.bf16.mxu0 0
      %2235 = vmatmul.mubr.bf16.gmra.mrb[0].mxu0 %v2120
      %v2236 = vpop.f32.mrb[0].mxu0
      %v2237 = vadd.f32 %v2096, %v2236
      %v2238 = vpop.f32.mrb[0].mxu0
      %v2239 = vpop.f32.mrb[0].mxu0
      %v2240 = vadd.f32 %v2096, %v2239
      %v2241 = vpop.f32.mrb[0].mxu0
      %2242 = vmatprep.mubr.bf16.mxu0 0
      %2243 = vmatmul.mubr.bf16.gmra.mrb[0].mxu0 %v2123
      %v2244 = vpop.f32.mrb[0].mxu0
      %v2245 = vadd.f32 %v2096, %v2244
      %v2246 = vpop.f32.mrb[0].mxu0
      %v2247 = vpop.f32.mrb[0].mxu0
      %v2248 = vadd.f32 %v2096, %v2247
      %v2249 = vpop.f32.mrb[0].mxu0
      %2250 = vmatprep.mubr.bf16.mxu0 0
      %2251 = vmatmul.mubr.bf16.gmra.mrb[0].mxu0 %v2126
      %v2252 = vpop.f32.mrb[0].mxu0
      %v2253 = vadd.f32 %v2096, %v2252
      %v2254 = vpop.f32.mrb[0].mxu0
      %v2255 = vpop.f32.mrb[0].mxu0
      %v2256 = vadd.f32 %v2096, %v2255
      %v2257 = vpop.f32.mrb[0].mxu0
      %2258 = vmatprep.mubr.bf16.mxu0 0
      %2259 = vmatmul.mubr.bf16.gmra.mrb[0].mxu0 %v2129
      %v2260 = vpop.f32.mrb[0].mxu0
      %v2261 = vadd.f32 %v2096, %v2260
      %v2262 = vpop.f32.mrb[0].mxu0
      %v2263 = vpop.f32.mrb[0].mxu0
      %v2264 = vadd.f32 %v2096, %v2263
      %v2265 = vpop.f32.mrb[0].mxu0
      %2266 = vmatprep.mubr.bf16.mxu0 0
      %2267 = vmatmul.mubr.bf16.gmra.mrb[0].mxu0 %v2132
      %v2268 = vpop.f32.mrb[0].mxu0
      %v2269 = vadd.f32 %v2096, %v2268
      %v2270 = vpop.f32.mrb[0].mxu0
      %v2271 = vpop.f32.mrb[0].mxu0
      %v2272 = vadd.f32 %v2096, %v2271
      %v2273 = vpop.f32.mrb[0].mxu0
      %2274 = vmatprep.mubr.bf16.mxu0 0
      %2275 = vmatmul.mubr.bf16.gmra.mrb[0].mxu0 %v2135
      %v2276 = vpop.f32.mrb[0].mxu0
      %v2277 = vadd.f32 %v2096, %v2276
      %v2278 = vpop.f32.mrb[0].mxu0
      %v2279 = vpop.f32.mrb[0].mxu0
      %v2280 = vadd.f32 %v2096, %v2279
      %v2281 = vpop.f32.mrb[0].mxu0
      %2282 = vmatprep.mubr.bf16.mxu0 0
      %2283 = vmatmul.mubr.bf16.gmra.mrb[0].mxu0 %v2138
      %v2284 = vpop.f32.mrb[0].mxu0
      %v2285 = vadd.f32 %v2096, %v2284
      %v2286 = vpop.f32.mrb[0].mxu0
      %v2287 = vpop.f32.mrb[0].mxu0
      %v2288 = vadd.f32 %v2096, %v2287
      %v2289 = vpop.f32.mrb[0].mxu0
      %2290 = vmatprep.mubr.bf16.mxu0 0
      %2291 = vmatmul.mubr.bf16.gmra.mrb[0].mxu0 %v2141
      %v2292 = vpop.f32.mrb[0].mxu0
      %v2293 = vadd.f32 %v2096, %v2292
      %v2294 = vpop.f32.mrb[0].mxu0
      %v2295 = vpop.f32.mrb[0].mxu0
      %v2296 = vadd.f32 %v2096, %v2295
      %v2297 = vpop.f32.mrb[0].mxu0
      %2298 = vmatprep.mubr.bf16.mxu0 0
      %2299 = vmatmul.mubr.bf16.gmra.mrb[0].mxu0 %v2144
      %v2300 = vpop.f32.mrb[0].mxu0
      %v2301 = vadd.f32 %v2096, %v2300
      %v2302 = vpop.f32.mrb[0].mxu0
      %v2303 = vpop.f32.mrb[0].mxu0
      %v2304 = vadd.f32 %v2096, %v2303
      %v2305 = vpop.f32.mrb[0].mxu0
      %2306 = vdwg.mxu0
      %v2307 = vadd.f32 %v2181, %v388
      %v2308 = vadd.f32 %v2184, %v389
      %v2309 = vadd.f32 %v2189, %v390
      %v2310 = vadd.f32 %v2192, %v391
      %v2311 = vadd.f32 %v2197, %v392
      %v2312 = vadd.f32 %v2200, %v393
      %v2313 = vadd.f32 %v2205, %v394
      %v2314 = vadd.f32 %v2208, %v395
      %v2315 = vadd.f32 %v2213, %v396
      %v2316 = vadd.f32 %v2216, %v397
      %v2317 = vadd.f32 %v2221, %v398
      %v2318 = vadd.f32 %v2224, %v399
      %v2319 = vadd.f32 %v2229, %v400
      %v2320 = vadd.f32 %v2232, %v401
      %v2321 = vadd.f32 %v2237, %v402
      %v2322 = vadd.f32 %v2240, %v403
      %v2323 = vadd.f32 %v2245, %v404
      %v2324 = vadd.f32 %v2248, %v405
      %v2325 = vadd.f32 %v2253, %v406
      %v2326 = vadd.f32 %v2256, %v407
      %v2327 = vadd.f32 %v2261, %v408
      %v2328 = vadd.f32 %v2264, %v409
      %v2329 = vadd.f32 %v2269, %v410
      %v2330 = vadd.f32 %v2272, %v411
      %v2331 = vadd.f32 %v2277, %v412
      %v2332 = vadd.f32 %v2280, %v413
      %v2333 = vadd.f32 %v2285, %v414
      %v2334 = vadd.f32 %v2288, %v415
      %v2335 = vadd.f32 %v2293, %v416
      %v2336 = vadd.f32 %v2296, %v417
      %v2337 = vadd.f32 %v2301, %v418
      %v2338 = vadd.f32 %v2304, %v419
      %2339 = vst.msk [vmem:[%s386] sm:$0xff] %vm445, %v2307
      %2340 = vst.msk [vmem:[%s386 + $0x8] sm:$0xff] %vm445, %v2308
      %2341 = vst.msk [vmem:[%s386 + $0x10] sm:$0xff] %vm445, %v2309
      %2342 = vst.msk [vmem:[%s386 + $0x18] sm:$0xff] %vm445, %v2310
      %2343 = vst.msk [vmem:[%s386 + $0x20] sm:$0xff] %vm445, %v2311
      %2344 = vst.msk [vmem:[%s386 + $0x28] sm:$0xff] %vm445, %v2312
      %2345 = vst.msk [vmem:[%s386 + $0x30] sm:$0xff] %vm445, %v2313
      %2346 = vst.msk [vmem:[%s386 + $0x38] sm:$0xff] %vm445, %v2314
      %2347 = vst.msk [vmem:[%s386 + $0x40] sm:$0xff] %vm445, %v2315
      %2348 = vst.msk [vmem:[%s386 + $0x48] sm:$0xff] %vm445, %v2316
      %2349 = vst.msk [vmem:[%s386 + $0x50] sm:$0xff] %vm445, %v2317
      %2350 = vst.msk [vmem:[%s386 + $0x58] sm:$0xff] %vm445, %v2318
      %2351 = vst.msk [vmem:[%s386 + $0x60] sm:$0xff] %vm445, %v2319
      %2352 = vst.msk [vmem:[%s386 + $0x68] sm:$0xff] %vm445, %v2320
      %2353 = vst.msk [vmem:[%s386 + $0x70] sm:$0xff] %vm445, %v2321
      %2354 = vst.msk [vmem:[%s386 + $0x78] sm:$0xff] %vm445, %v2322
      %2355 = vst.msk [vmem:[%s386 + $0x80] sm:$0xff] %vm445, %v2323
      %2356 = vst.msk [vmem:[%s386 + $0x88] sm:$0xff] %vm445, %v2324
      %2357 = vst.msk [vmem:[%s386 + $0x90] sm:$0xff] %vm445, %v2325
      %2358 = vst.msk [vmem:[%s386 + $0x98] sm:$0xff] %vm445, %v2326
      %2359 = vst.msk [vmem:[%s386 + $0xa0] sm:$0xff] %vm445, %v2327
      %2360 = vst.msk [vmem:[%s386 + $0xa8] sm:$0xff] %vm445, %v2328
      %2361 = vst.msk [vmem:[%s386 + $0xb0] sm:$0xff] %vm445, %v2329
      %2362 = vst.msk [vmem:[%s386 + $0xb8] sm:$0xff] %vm445, %v2330
      %2363 = vst.msk [vmem:[%s386 + $0xc0] sm:$0xff] %vm445, %v2331
      %2364 = vst.msk [vmem:[%s386 + $0xc8] sm:$0xff] %vm445, %v2332
      %2365 = vst.msk [vmem:[%s386 + $0xd0] sm:$0xff] %vm445, %v2333
      %2366 = vst.msk [vmem:[%s386 + $0xd8] sm:$0xff] %vm445, %v2334
      %2367 = vst.msk [vmem:[%s386 + $0xe0] sm:$0xff] %vm445, %v2335
      %2368 = vst.msk [vmem:[%s386 + $0xe8] sm:$0xff] %vm445, %v2336
      %2369 = vst.msk [vmem:[%s386 + $0xf0] sm:$0xff] %vm445, %v2337
      %2370 = vst.msk [vmem:[%s386 + $0xf8] sm:$0xff] %vm445, %v2338
      %p2371 = scmp.lt.s32.totalorder %s22, 1
      %s2372 = scalar_select %p2371, %s22, 1
      %s2373 = smul.addr %s2372, 32
      %s2374 = smul.addr %s2373, 8
      %s2375 = scalar_lea.vmem %s11, %s2374
      // Predicated region
      $region65: #{tpu_custom_call.1} parent=63 // pred_check
        %p2376 = pneg %p276
      $region66: #{tpu_custom_call.1} parent=63 // pred_check_branch
        %2378 = sbr.rel (%p2376) target = $region68
      $region67: #{tpu_custom_call.1} parent=63 // pred_region
        _
      $region68: #{tpu_custom_call.1} parent=63 // pred_fallthru
        _
    $region64: #{tpu_custom_call.1} parent=5 // pred_fallthru
      _
    %p2379 = scmp.le.s32.totalorder 2, %s17
    // Predicated region
    $region69: #{tpu_custom_call.1} parent=5 // pred_check
      %p2380 = pneg %p2379
    $region70: #{tpu_custom_call.1} parent=5 // pred_check_branch
      %2382 = sbr.rel (%p2380) target = $region72
    $region71: #{tpu_custom_call.1} parent=5 // pred_region
      %s2383 = ssub.s32 %s17, 2
      // Predicated region
      $region73: #{tpu_custom_call.1} parent=71 // pred_check
        %p2384 = pneg %p282
      $region74: #{tpu_custom_call.1} parent=71 // pred_check_branch
        %2386 = sbr.rel (%p2384) target = $region76
      $region75: #{tpu_custom_call.1} parent=71 // pred_region
        %p2387 = scmp.lt.s32.totalorder %s23, 1
        %s2388 = scalar_select %p2387, %s23, 1
        %s2389 = smul.addr %s2388, 32
        %s2390 = smul.addr %s2389, 8
        %s2391 = scalar_lea.vmem %s11, %s2390
      $region76: #{tpu_custom_call.1} parent=71 // pred_fallthru
        _
    $region72: #{tpu_custom_call.1} parent=5 // pred_fallthru
      _
  $region6: #{tpu_custom_call.1} parent=0 // loop_footer
    %s21 = sadd.s32 1, %s17
  $region7: #{tpu_custom_call.1} parent=0 // loop_footer_branch
    %16 = sbr.rel target = $region3
  $region8: #{tpu_custom_call.1} parent=0 // loop_exit
    _

</llo_original>
